<compile_context>
chip_gen: v7x
topology: tpu7x:2x2x1
jax: 0.10.0
libtpu: 0.0.40
codegen_flags: <defaults>
</compile_context>

<pallas_src>
import functools

import jax
import jax.numpy as jnp
import numpy as np
from jax.experimental import pallas as pl
from jax.experimental.pallas import tpu as pltpu


# ----------------------------- Pallas kernel -------------------------------

def lstm_kernel(xg_ref, w01_ref, whh1_ref, b1_ref, wlin_ref, blin_ref, out_ref):
    # xg_ref:   (T, B, 4H)  precomputed x @ W_ih0 + (b_ih0 + b_hh0), g-cols x2
    # w01_ref:  (H, 8H)     [W_hh0 | W_ih1] stacked along lanes, g-cols x2
    # whh1_ref: (H, 4H)     layer-1 recurrent weight, g-cols x2
    # b1_ref:   (1, 4H)     layer-1 combined bias, g-block x2
    # wlin_ref: (H, O_pad)  linear head (lane-padded)
    # blin_ref: (1, O_pad)
    # out_ref:  (B, O_pad)
    T, B, H4 = xg_ref.shape
    H = H4 // 4

    w01 = w01_ref[...]
    whh1 = whh1_ref[...]
    # Hoisted out of the unrolled loop: JAX does not CSE broadcast_in_dim.
    bb1 = jnp.broadcast_to(b1_ref[...], (B, H4))

    def half_cell(gates, c):
        # Single full-tile EUP pass.  The g-gate preactivation was pre-scaled
        # by 2 in the wrapper, so tanh(a) == 2*sigmoid(2a) - 1 is a cheap VPU
        # expression on the already-computed sigmoid tile.
        sg = jax.nn.sigmoid(gates)
        i = sg[:, 0 * H:1 * H]
        f = sg[:, 1 * H:2 * H]
        g = 2.0 * sg[:, 2 * H:3 * H] - 1.0
        o = sg[:, 3 * H:4 * H]
        c_new = f * c + i * g
        h_new = o * jnp.tanh(c_new)
        return h_new, c_new

    zeros = jnp.zeros((B, H), jnp.float32)
    h0, c0, h1, c1 = zeros, zeros, zeros, zeros
    pre0 = jnp.zeros((B, H4), jnp.float32)   # h0_{t-1} @ W_hh0 contribution

    # T is small and static: fully unrolled so MXU pushes / EUP / VPU work can
    # interleave across timesteps.
    for t in range(T):
        # Layer 0, step t: input projection already hoisted, recurrent part
        # came out of the previous step's fused dot.
        h0, c0 = half_cell(xg_ref[t] + pre0, c0)

        # TODO(synk): nn.LSTM inter-layer dropout=0.2 is train-only; eval
        # forward is identity, so nothing to apply here.

        # Single MXU push on the serial chain:
        #   p01 = h0_t @ [W_hh0 | W_ih1]
        # first 4H lanes -> layer-0 recurrence for t+1, last 4H -> layer-1 ih.
        p01 = jnp.dot(h0, w01, preferred_element_type=jnp.float32)   # (B, 8H)
        pre0 = p01[:, :H4]

        # Layer-1 recurrent dot depends only on h1_{t-1} (off the main chain),
        # so it can issue while layer-0 work for this step is still running.
        r1 = jnp.dot(h1, whh1, preferred_element_type=jnp.float32)
        h1, c1 = half_cell(p01[:, H4:] + r1 + bb1, c1)

    # linear(lstm_out[:, -1]) == head applied to the top layer's last h.
    # Output width is lane-padded to 128 -> unmasked stores.
    out_ref[...] = (jnp.dot(h1, wlin_ref[...], preferred_element_type=jnp.float32)
                    + blin_ref[...])


# ------------------------------ wrapper ------------------------------------

def _lstm_model_forward(x, params, *, batch_tile=8):
    """x: (B, T, I) float32 -> (B, O) float32."""
    B, T, I = x.shape
    H = params["whh0"].shape[0]
    O = params["wlin"].shape[1]
    H4 = 4 * H

    # tanh(a) = 2*sigmoid(2a) - 1: pre-scale every g-gate preactivation
    # contribution by 2 so the kernel needs one EUP pass per cell.
    def scale_g(w):
        return w.at[..., 2 * H:3 * H].multiply(2.0)

    wih0 = scale_g(params["wih0"])
    whh0 = scale_g(params["whh0"])
    wih1 = scale_g(params["wih1"])
    whh1 = scale_g(params["whh1"])
    b0 = scale_g(params["b0"])
    b1 = scale_g(params["b1"])

    # Pad batch to a sublane multiple so every vreg row / MXU row is used.
    assert batch_tile % 8 == 0
    B_pad = max(batch_tile, -(-B // batch_tile) * batch_tile)
    x_p = jnp.pad(x, ((0, B_pad - B), (0, 0), (0, 0)))
    x_tm = jnp.transpose(x_p, (1, 0, 2)).astype(jnp.float32)       # (T, B_pad, I)

    # Hoist layer-0 input projection for ALL timesteps: one big matmul instead
    # of T tiny ones inside the recurrence.  b0 = b_ih0 + b_hh0 folded in.
    xg = (jnp.einsum("tbi,ih->tbh", x_tm, wih0) + b0).astype(jnp.float32)

    # Assemble the fused per-step RHS once: [W_hh0 | W_ih1]  (H, 8H).
    w01 = jnp.concatenate([whh0, wih1], axis=1)

    # Lane-dense output: pad O up to a multiple of 128, slice back afterwards.
    O_pad = max(128, -(-O // 128) * 128)
    wlin_p = jnp.pad(params["wlin"], ((0, 0), (0, O_pad - O)))
    blin_p = jnp.pad(params["blin"], ((0, 0), (0, O_pad - O)))

    grid = (B_pad // batch_tile,)
    out_p = pl.pallas_call(
        lstm_kernel,
        out_shape=jax.ShapeDtypeStruct((B_pad, O_pad), jnp.float32),
        grid=grid,
        in_specs=[
            pl.BlockSpec((T, batch_tile, H4), lambda b: (0, b, 0)),   # xg
            pl.BlockSpec((H, 2 * H4), lambda b: (0, 0)),              # w01
            pl.BlockSpec((H, H4), lambda b: (0, 0)),                  # whh1
            pl.BlockSpec((1, H4), lambda b: (0, 0)),                  # b1
            pl.BlockSpec((H, O_pad), lambda b: (0, 0)),               # wlin
            pl.BlockSpec((1, O_pad), lambda b: (0, 0)),               # blin
        ],
        out_specs=pl.BlockSpec((batch_tile, O_pad), lambda b: (b, 0)),
        compiler_params=pltpu.CompilerParams(
            # Batch tiles are independent -> shard across v7x's two
            # TensorCores when B_pad/batch_tile >= 2 (grid of 1 here).
            dimension_semantics=("parallel",),
        ),
    )(xg, w01, whh1, b1, wlin_p, blin_p)

    return out_p[:B, :O]


# One jit over pad/transpose/projection/pallas_call/slice so per-op dispatch
# overhead does not dominate this few-microsecond kernel.
lstm_model_forward = jax.jit(_lstm_model_forward, static_argnames=("batch_tile",))


# --------------------------- pure-JAX reference -----------------------------

def ref_forward(x, params):
    B, T, I = x.shape
    H = params["whh0"].shape[0]

    def cell(x_t, h, c, wih, whh, b):
        gates = x_t @ wih + h @ whh + b
        i = jax.nn.sigmoid(gates[:, 0 * H:1 * H])
        f = jax.nn.sigmoid(gates[:, 1 * H:2 * H])
        g = jnp.tanh(gates[:, 2 * H:3 * H])
        o = jax.nn.sigmoid(gates[:, 3 * H:4 * H])
        c_new = f * c + i * g
        return o * jnp.tanh(c_new), c_new

    h0 = c0 = h1 = c1 = jnp.zeros((B, H), jnp.float32)
    for t in range(T):
        h0, c0 = cell(x[:, t, :], h0, c0, params["wih0"], params["whh0"], params["b0"])
        h1, c1 = cell(h0, h1, c1, params["wih1"], params["whh1"], params["b1"])
    return h1 @ params["wlin"] + params["blin"]


# --------------------------- parameter init ---------------------------------

def init_params(key, input_size, hidden, output_size):
    """Deterministic init mirroring PyTorch shapes (weights stored transposed)."""
    k = 1.0 / np.sqrt(hidden)
    keys = jax.random.split(key, 10)

    def u(kk, shape):
        return jax.random.uniform(kk, shape, jnp.float32, minval=-k, maxval=k)

    return {
        # layer 0: input_size -> hidden
        "wih0": u(keys[0], (input_size, 4 * hidden)),
        "whh0": u(keys[1], (hidden, 4 * hidden)),
        "b0":   u(keys[2], (1, 4 * hidden)) + u(keys[3], (1, 4 * hidden)),  # b_ih + b_hh
        # layer 1: hidden -> hidden
        "wih1": u(keys[4], (hidden, 4 * hidden)),
        "whh1": u(keys[5], (hidden, 4 * hidden)),
        "b1":   u(keys[6], (1, 4 * hidden)) + u(keys[7], (1, 4 * hidden)),
        # linear head: hidden -> output_size
        "wlin": u(keys[8], (hidden, output_size)),
        "blin": u(keys[9], (1, output_size)),
    }


# --------------------------------- main --------------------------------------

if __name__ == "__main__":
    B, T, I, H, O = 2, 8, 1, 32, 1   # batch, seq, input_size, hidden, output

    root = jax.random.PRNGKey(0)
    kx, kp = jax.random.split(root)
    x = jax.random.normal(kx, (B, T, I), jnp.float32)
    params = init_params(kp, I, H, O)

    out = jax.block_until_ready(lstm_model_forward(x, params))
    ref = ref_forward(x, params)

    np.testing.assert_allclose(np.asarray(out), np.asarray(ref), rtol=1e-5, atol=1e-5)
    assert out.shape == (B, O)
    print("KERNEL_OK")
</pallas_src>

<mosaic_0001>
module attributes {stable_mosaic.version = 11 : i64} {
  func.func @lstm_kernel(%arg0: i32, %arg1: memref<8x8x128xf32, #tpu.memory_space<vmem>>, %arg2: memref<32x256xf32, #tpu.memory_space<vmem>>, %arg3: memref<32x128xf32, #tpu.memory_space<vmem>>, %arg4: memref<1x128xf32, #tpu.memory_space<vmem>>, %arg5: memref<32x128xf32, #tpu.memory_space<vmem>>, %arg6: memref<1x128xf32, #tpu.memory_space<vmem>>, %arg7: memref<8x128xf32, #tpu.memory_space<vmem>>) attributes {dimension_semantics = [#tpu.dimension_semantics<parallel>], iteration_bounds = array<i64: 1>, scalar_prefetch = 0 : i64, scratch_operands = 0 : i64, tpu.core_type = #tpu.core_type<tc>, window_params = [{transform_indices = @transform_0, window_bounds = array<i64: 8, 8, 128>}, {pipeline_mode = #tpu.pipeline_mode<synchronous>, transform_indices = @transform_1, window_bounds = array<i64: 32, 256>}, {pipeline_mode = #tpu.pipeline_mode<synchronous>, transform_indices = @transform_2, window_bounds = array<i64: 32, 128>}, {pipeline_mode = #tpu.pipeline_mode<synchronous>, transform_indices = @transform_3, window_bounds = array<i64: 1, 128>}, {pipeline_mode = #tpu.pipeline_mode<synchronous>, transform_indices = @transform_4, window_bounds = array<i64: 32, 128>}, {pipeline_mode = #tpu.pipeline_mode<synchronous>, transform_indices = @transform_5, window_bounds = array<i64: 1, 128>}, {transform_indices = @transform_6, window_bounds = array<i64: 8, 128>}]} {
    %c0 = arith.constant 0 : index
    %c0_0 = arith.constant 0 : index
    %0 = vector.load %arg2[%c0, %c0_0] : memref<32x256xf32, #tpu.memory_space<vmem>>, vector<32x256xf32>
    %c0_1 = arith.constant 0 : index
    %c0_2 = arith.constant 0 : index
    %1 = vector.load %arg3[%c0_1, %c0_2] : memref<32x128xf32, #tpu.memory_space<vmem>>, vector<32x128xf32>
    %c0_3 = arith.constant 0 : index
    %c0_4 = arith.constant 0 : index
    %2 = vector.load %arg4[%c0_3, %c0_4] : memref<1x128xf32, #tpu.memory_space<vmem>>, vector<1x128xf32>
    %3 = vector.shape_cast %2 : vector<1x128xf32> to vector<1x128xf32>
    %4 = vector.broadcast %3 : vector<1x128xf32> to vector<8x128xf32>
    %cst = arith.constant 0.000000e+00 : f32
    %5 = vector.broadcast %cst : f32 to vector<8x32xf32>
    %cst_5 = arith.constant 0.000000e+00 : f32
    %6 = vector.broadcast %cst_5 : f32 to vector<8x128xf32>
    %c0_6 = arith.constant 0 : index
    %c0_7 = arith.constant 0 : index
    %c0_8 = arith.constant 0 : index
    %7 = vector.load %arg1[%c0_6, %c0_7, %c0_8] : memref<8x8x128xf32, #tpu.memory_space<vmem>>, vector<1x8x128xf32>
    %8 = vector.shape_cast %7 : vector<1x8x128xf32> to vector<8x128xf32>
    %9 = arith.addf %8, %6 : vector<8x128xf32>
    %10 = arith.negf %9 : vector<8x128xf32>
    %11 = math.exp %10 : vector<8x128xf32>
    %cst_9 = arith.constant 1.000000e+00 : f32
    %12 = vector.broadcast %cst_9 : f32 to vector<8x128xf32>
    %13 = arith.addf %12, %11 : vector<8x128xf32>
    %14 = arith.divf %12, %13 : vector<8x128xf32>
    %15 = vector.extract_strided_slice %14 {offsets = [0, 0], sizes = [8, 32], strides = [1, 1]} : vector<8x128xf32> to vector<8x32xf32>
    %16 = vector.extract_strided_slice %14 {offsets = [0, 32], sizes = [8, 32], strides = [1, 1]} : vector<8x128xf32> to vector<8x32xf32>
    %17 = vector.extract_strided_slice %14 {offsets = [0, 64], sizes = [8, 32], strides = [1, 1]} : vector<8x128xf32> to vector<8x32xf32>
    %cst_10 = arith.constant 2.000000e+00 : f32
    %18 = vector.broadcast %cst_10 : f32 to vector<8x32xf32>
    %19 = arith.mulf %18, %17 : vector<8x32xf32>
    %cst_11 = arith.constant 1.000000e+00 : f32
    %20 = vector.broadcast %cst_11 : f32 to vector<8x32xf32>
    %21 = arith.subf %19, %20 : vector<8x32xf32>
    %22 = vector.extract_strided_slice %14 {offsets = [0, 96], sizes = [8, 32], strides = [1, 1]} : vector<8x128xf32> to vector<8x32xf32>
    %23 = arith.mulf %16, %5 : vector<8x32xf32>
    %24 = arith.mulf %15, %21 : vector<8x32xf32>
    %25 = arith.addf %23, %24 : vector<8x32xf32>
    %26 = math.tanh %25 : vector<8x32xf32>
    %27 = arith.mulf %22, %26 : vector<8x32xf32>
    %cst_12 = arith.constant dense<0.000000e+00> : vector<8x256xf32>
    %28 = tpu.matmul %27, %0, %cst_12 {dimension_numbers = #tpu.dot_dimension_numbers<[1], [0], [0], [1], [0, 0, 1, 1], [], []>} : vector<8x32xf32>, vector<32x256xf32>, vector<8x256xf32> -> vector<8x256xf32>
    %29 = vector.extract_strided_slice %28 {offsets = [0, 0], sizes = [8, 128], strides = [1, 1]} : vector<8x256xf32> to vector<8x128xf32>
    %cst_13 = arith.constant dense<0.000000e+00> : vector<8x128xf32>
    %30 = tpu.matmul %5, %1, %cst_13 {dimension_numbers = #tpu.dot_dimension_numbers<[1], [0], [0], [1], [0, 0, 1, 1], [], []>} : vector<8x32xf32>, vector<32x128xf32>, vector<8x128xf32> -> vector<8x128xf32>
    %31 = vector.extract_strided_slice %28 {offsets = [0, 128], sizes = [8, 128], strides = [1, 1]} : vector<8x256xf32> to vector<8x128xf32>
    %32 = arith.addf %31, %30 : vector<8x128xf32>
    %33 = arith.addf %32, %4 : vector<8x128xf32>
    %34 = arith.negf %33 : vector<8x128xf32>
    %35 = math.exp %34 : vector<8x128xf32>
    %cst_14 = arith.constant 1.000000e+00 : f32
    %36 = vector.broadcast %cst_14 : f32 to vector<8x128xf32>
    %37 = arith.addf %36, %35 : vector<8x128xf32>
    %38 = arith.divf %36, %37 : vector<8x128xf32>
    %39 = vector.extract_strided_slice %38 {offsets = [0, 0], sizes = [8, 32], strides = [1, 1]} : vector<8x128xf32> to vector<8x32xf32>
    %40 = vector.extract_strided_slice %38 {offsets = [0, 32], sizes = [8, 32], strides = [1, 1]} : vector<8x128xf32> to vector<8x32xf32>
    %41 = vector.extract_strided_slice %38 {offsets = [0, 64], sizes = [8, 32], strides = [1, 1]} : vector<8x128xf32> to vector<8x32xf32>
    %cst_15 = arith.constant 2.000000e+00 : f32
    %42 = vector.broadcast %cst_15 : f32 to vector<8x32xf32>
    %43 = arith.mulf %42, %41 : vector<8x32xf32>
    %cst_16 = arith.constant 1.000000e+00 : f32
    %44 = vector.broadcast %cst_16 : f32 to vector<8x32xf32>
    %45 = arith.subf %43, %44 : vector<8x32xf32>
    %46 = vector.extract_strided_slice %38 {offsets = [0, 96], sizes = [8, 32], strides = [1, 1]} : vector<8x128xf32> to vector<8x32xf32>
    %47 = arith.mulf %40, %5 : vector<8x32xf32>
    %48 = arith.mulf %39, %45 : vector<8x32xf32>
    %49 = arith.addf %47, %48 : vector<8x32xf32>
    %50 = math.tanh %49 : vector<8x32xf32>
    %51 = arith.mulf %46, %50 : vector<8x32xf32>
    %c1 = arith.constant 1 : index
    %c0_17 = arith.constant 0 : index
    %c0_18 = arith.constant 0 : index
    %52 = vector.load %arg1[%c1, %c0_17, %c0_18] : memref<8x8x128xf32, #tpu.memory_space<vmem>>, vector<1x8x128xf32>
    %53 = vector.shape_cast %52 : vector<1x8x128xf32> to vector<8x128xf32>
    %54 = arith.addf %53, %29 : vector<8x128xf32>
    %55 = arith.negf %54 : vector<8x128xf32>
    %56 = math.exp %55 : vector<8x128xf32>
    %cst_19 = arith.constant 1.000000e+00 : f32
    %57 = vector.broadcast %cst_19 : f32 to vector<8x128xf32>
    %58 = arith.addf %57, %56 : vector<8x128xf32>
    %59 = arith.divf %57, %58 : vector<8x128xf32>
    %60 = vector.extract_strided_slice %59 {offsets = [0, 0], sizes = [8, 32], strides = [1, 1]} : vector<8x128xf32> to vector<8x32xf32>
    %61 = vector.extract_strided_slice %59 {offsets = [0, 32], sizes = [8, 32], strides = [1, 1]} : vector<8x128xf32> to vector<8x32xf32>
    %62 = vector.extract_strided_slice %59 {offsets = [0, 64], sizes = [8, 32], strides = [1, 1]} : vector<8x128xf32> to vector<8x32xf32>
    %cst_20 = arith.constant 2.000000e+00 : f32
    %63 = vector.broadcast %cst_20 : f32 to vector<8x32xf32>
    %64 = arith.mulf %63, %62 : vector<8x32xf32>
    %cst_21 = arith.constant 1.000000e+00 : f32
    %65 = vector.broadcast %cst_21 : f32 to vector<8x32xf32>
    %66 = arith.subf %64, %65 : vector<8x32xf32>
    %67 = vector.extract_strided_slice %59 {offsets = [0, 96], sizes = [8, 32], strides = [1, 1]} : vector<8x128xf32> to vector<8x32xf32>
    %68 = arith.mulf %61, %25 : vector<8x32xf32>
    %69 = arith.mulf %60, %66 : vector<8x32xf32>
    %70 = arith.addf %68, %69 : vector<8x32xf32>
    %71 = math.tanh %70 : vector<8x32xf32>
    %72 = arith.mulf %67, %71 : vector<8x32xf32>
    %cst_22 = arith.constant dense<0.000000e+00> : vector<8x256xf32>
    %73 = tpu.matmul %72, %0, %cst_22 {dimension_numbers = #tpu.dot_dimension_numbers<[1], [0], [0], [1], [0, 0, 1, 1], [], []>} : vector<8x32xf32>, vector<32x256xf32>, vector<8x256xf32> -> vector<8x256xf32>
    %74 = vector.extract_strided_slice %73 {offsets = [0, 0], sizes = [8, 128], strides = [1, 1]} : vector<8x256xf32> to vector<8x128xf32>
    %cst_23 = arith.constant dense<0.000000e+00> : vector<8x128xf32>
    %75 = tpu.matmul %51, %1, %cst_23 {dimension_numbers = #tpu.dot_dimension_numbers<[1], [0], [0], [1], [0, 0, 1, 1], [], []>} : vector<8x32xf32>, vector<32x128xf32>, vector<8x128xf32> -> vector<8x128xf32>
    %76 = vector.extract_strided_slice %73 {offsets = [0, 128], sizes = [8, 128], strides = [1, 1]} : vector<8x256xf32> to vector<8x128xf32>
    %77 = arith.addf %76, %75 : vector<8x128xf32>
    %78 = arith.addf %77, %4 : vector<8x128xf32>
    %79 = arith.negf %78 : vector<8x128xf32>
    %80 = math.exp %79 : vector<8x128xf32>
    %cst_24 = arith.constant 1.000000e+00 : f32
    %81 = vector.broadcast %cst_24 : f32 to vector<8x128xf32>
    %82 = arith.addf %81, %80 : vector<8x128xf32>
    %83 = arith.divf %81, %82 : vector<8x128xf32>
    %84 = vector.extract_strided_slice %83 {offsets = [0, 0], sizes = [8, 32], strides = [1, 1]} : vector<8x128xf32> to vector<8x32xf32>
    %85 = vector.extract_strided_slice %83 {offsets = [0, 32], sizes = [8, 32], strides = [1, 1]} : vector<8x128xf32> to vector<8x32xf32>
    %86 = vector.extract_strided_slice %83 {offsets = [0, 64], sizes = [8, 32], strides = [1, 1]} : vector<8x128xf32> to vector<8x32xf32>
    %cst_25 = arith.constant 2.000000e+00 : f32
    %87 = vector.broadcast %cst_25 : f32 to vector<8x32xf32>
    %88 = arith.mulf %87, %86 : vector<8x32xf32>
    %cst_26 = arith.constant 1.000000e+00 : f32
    %89 = vector.broadcast %cst_26 : f32 to vector<8x32xf32>
    %90 = arith.subf %88, %89 : vector<8x32xf32>
    %91 = vector.extract_strided_slice %83 {offsets = [0, 96], sizes = [8, 32], strides = [1, 1]} : vector<8x128xf32> to vector<8x32xf32>
    %92 = arith.mulf %85, %49 : vector<8x32xf32>
    %93 = arith.mulf %84, %90 : vector<8x32xf32>
    %94 = arith.addf %92, %93 : vector<8x32xf32>
    %95 = math.tanh %94 : vector<8x32xf32>
    %96 = arith.mulf %91, %95 : vector<8x32xf32>
    %c2 = arith.constant 2 : index
    %c0_27 = arith.constant 0 : index
    %c0_28 = arith.constant 0 : index
    %97 = vector.load %arg1[%c2, %c0_27, %c0_28] : memref<8x8x128xf32, #tpu.memory_space<vmem>>, vector<1x8x128xf32>
    %98 = vector.shape_cast %97 : vector<1x8x128xf32> to vector<8x128xf32>
    %99 = arith.addf %98, %74 : vector<8x128xf32>
    %100 = arith.negf %99 : vector<8x128xf32>
    %101 = math.exp %100 : vector<8x128xf32>
    %cst_29 = arith.constant 1.000000e+00 : f32
    %102 = vector.broadcast %cst_29 : f32 to vector<8x128xf32>
    %103 = arith.addf %102, %101 : vector<8x128xf32>
    %104 = arith.divf %102, %103 : vector<8x128xf32>
    %105 = vector.extract_strided_slice %104 {offsets = [0, 0], sizes = [8, 32], strides = [1, 1]} : vector<8x128xf32> to vector<8x32xf32>
    %106 = vector.extract_strided_slice %104 {offsets = [0, 32], sizes = [8, 32], strides = [1, 1]} : vector<8x128xf32> to vector<8x32xf32>
    %107 = vector.extract_strided_slice %104 {offsets = [0, 64], sizes = [8, 32], strides = [1, 1]} : vector<8x128xf32> to vector<8x32xf32>
    %cst_30 = arith.constant 2.000000e+00 : f32
    %108 = vector.broadcast %cst_30 : f32 to vector<8x32xf32>
    %109 = arith.mulf %108, %107 : vector<8x32xf32>
    %cst_31 = arith.constant 1.000000e+00 : f32
    %110 = vector.broadcast %cst_31 : f32 to vector<8x32xf32>
    %111 = arith.subf %109, %110 : vector<8x32xf32>
    %112 = vector.extract_strided_slice %104 {offsets = [0, 96], sizes = [8, 32], strides = [1, 1]} : vector<8x128xf32> to vector<8x32xf32>
    %113 = arith.mulf %106, %70 : vector<8x32xf32>
    %114 = arith.mulf %105, %111 : vector<8x32xf32>
    %115 = arith.addf %113, %114 : vector<8x32xf32>
    %116 = math.tanh %115 : vector<8x32xf32>
    %117 = arith.mulf %112, %116 : vector<8x32xf32>
    %cst_32 = arith.constant dense<0.000000e+00> : vector<8x256xf32>
    %118 = tpu.matmul %117, %0, %cst_32 {dimension_numbers = #tpu.dot_dimension_numbers<[1], [0], [0], [1], [0, 0, 1, 1], [], []>} : vector<8x32xf32>, vector<32x256xf32>, vector<8x256xf32> -> vector<8x256xf32>
    %119 = vector.extract_strided_slice %118 {offsets = [0, 0], sizes = [8, 128], strides = [1, 1]} : vector<8x256xf32> to vector<8x128xf32>
    %cst_33 = arith.constant dense<0.000000e+00> : vector<8x128xf32>
    %120 = tpu.matmul %96, %1, %cst_33 {dimension_numbers = #tpu.dot_dimension_numbers<[1], [0], [0], [1], [0, 0, 1, 1], [], []>} : vector<8x32xf32>, vector<32x128xf32>, vector<8x128xf32> -> vector<8x128xf32>
    %121 = vector.extract_strided_slice %118 {offsets = [0, 128], sizes = [8, 128], strides = [1, 1]} : vector<8x256xf32> to vector<8x128xf32>
    %122 = arith.addf %121, %120 : vector<8x128xf32>
    %123 = arith.addf %122, %4 : vector<8x128xf32>
    %124 = arith.negf %123 : vector<8x128xf32>
    %125 = math.exp %124 : vector<8x128xf32>
    %cst_34 = arith.constant 1.000000e+00 : f32
    %126 = vector.broadcast %cst_34 : f32 to vector<8x128xf32>
    %127 = arith.addf %126, %125 : vector<8x128xf32>
    %128 = arith.divf %126, %127 : vector<8x128xf32>
    %129 = vector.extract_strided_slice %128 {offsets = [0, 0], sizes = [8, 32], strides = [1, 1]} : vector<8x128xf32> to vector<8x32xf32>
    %130 = vector.extract_strided_slice %128 {offsets = [0, 32], sizes = [8, 32], strides = [1, 1]} : vector<8x128xf32> to vector<8x32xf32>
    %131 = vector.extract_strided_slice %128 {offsets = [0, 64], sizes = [8, 32], strides = [1, 1]} : vector<8x128xf32> to vector<8x32xf32>
    %cst_35 = arith.constant 2.000000e+00 : f32
    %132 = vector.broadcast %cst_35 : f32 to vector<8x32xf32>
    %133 = arith.mulf %132, %131 : vector<8x32xf32>
    %cst_36 = arith.constant 1.000000e+00 : f32
    %134 = vector.broadcast %cst_36 : f32 to vector<8x32xf32>
    %135 = arith.subf %133, %134 : vector<8x32xf32>
    %136 = vector.extract_strided_slice %128 {offsets = [0, 96], sizes = [8, 32], strides = [1, 1]} : vector<8x128xf32> to vector<8x32xf32>
    %137 = arith.mulf %130, %94 : vector<8x32xf32>
    %138 = arith.mulf %129, %135 : vector<8x32xf32>
    %139 = arith.addf %137, %138 : vector<8x32xf32>
    %140 = math.tanh %139 : vector<8x32xf32>
    %141 = arith.mulf %136, %140 : vector<8x32xf32>
    %c3 = arith.constant 3 : index
    %c0_37 = arith.constant 0 : index
    %c0_38 = arith.constant 0 : index
    %142 = vector.load %arg1[%c3, %c0_37, %c0_38] : memref<8x8x128xf32, #tpu.memory_space<vmem>>, vector<1x8x128xf32>
    %143 = vector.shape_cast %142 : vector<1x8x128xf32> to vector<8x128xf32>
    %144 = arith.addf %143, %119 : vector<8x128xf32>
    %145 = arith.negf %144 : vector<8x128xf32>
    %146 = math.exp %145 : vector<8x128xf32>
    %cst_39 = arith.constant 1.000000e+00 : f32
    %147 = vector.broadcast %cst_39 : f32 to vector<8x128xf32>
    %148 = arith.addf %147, %146 : vector<8x128xf32>
    %149 = arith.divf %147, %148 : vector<8x128xf32>
    %150 = vector.extract_strided_slice %149 {offsets = [0, 0], sizes = [8, 32], strides = [1, 1]} : vector<8x128xf32> to vector<8x32xf32>
    %151 = vector.extract_strided_slice %149 {offsets = [0, 32], sizes = [8, 32], strides = [1, 1]} : vector<8x128xf32> to vector<8x32xf32>
    %152 = vector.extract_strided_slice %149 {offsets = [0, 64], sizes = [8, 32], strides = [1, 1]} : vector<8x128xf32> to vector<8x32xf32>
    %cst_40 = arith.constant 2.000000e+00 : f32
    %153 = vector.broadcast %cst_40 : f32 to vector<8x32xf32>
    %154 = arith.mulf %153, %152 : vector<8x32xf32>
    %cst_41 = arith.constant 1.000000e+00 : f32
    %155 = vector.broadcast %cst_41 : f32 to vector<8x32xf32>
    %156 = arith.subf %154, %155 : vector<8x32xf32>
    %157 = vector.extract_strided_slice %149 {offsets = [0, 96], sizes = [8, 32], strides = [1, 1]} : vector<8x128xf32> to vector<8x32xf32>
    %158 = arith.mulf %151, %115 : vector<8x32xf32>
    %159 = arith.mulf %150, %156 : vector<8x32xf32>
    %160 = arith.addf %158, %159 : vector<8x32xf32>
    %161 = math.tanh %160 : vector<8x32xf32>
    %162 = arith.mulf %157, %161 : vector<8x32xf32>
    %cst_42 = arith.constant dense<0.000000e+00> : vector<8x256xf32>
    %163 = tpu.matmul %162, %0, %cst_42 {dimension_numbers = #tpu.dot_dimension_numbers<[1], [0], [0], [1], [0, 0, 1, 1], [], []>} : vector<8x32xf32>, vector<32x256xf32>, vector<8x256xf32> -> vector<8x256xf32>
    %164 = vector.extract_strided_slice %163 {offsets = [0, 0], sizes = [8, 128], strides = [1, 1]} : vector<8x256xf32> to vector<8x128xf32>
    %cst_43 = arith.constant dense<0.000000e+00> : vector<8x128xf32>
    %165 = tpu.matmul %141, %1, %cst_43 {dimension_numbers = #tpu.dot_dimension_numbers<[1], [0], [0], [1], [0, 0, 1, 1], [], []>} : vector<8x32xf32>, vector<32x128xf32>, vector<8x128xf32> -> vector<8x128xf32>
    %166 = vector.extract_strided_slice %163 {offsets = [0, 128], sizes = [8, 128], strides = [1, 1]} : vector<8x256xf32> to vector<8x128xf32>
    %167 = arith.addf %166, %165 : vector<8x128xf32>
    %168 = arith.addf %167, %4 : vector<8x128xf32>
    %169 = arith.negf %168 : vector<8x128xf32>
    %170 = math.exp %169 : vector<8x128xf32>
    %cst_44 = arith.constant 1.000000e+00 : f32
    %171 = vector.broadcast %cst_44 : f32 to vector<8x128xf32>
    %172 = arith.addf %171, %170 : vector<8x128xf32>
    %173 = arith.divf %171, %172 : vector<8x128xf32>
    %174 = vector.extract_strided_slice %173 {offsets = [0, 0], sizes = [8, 32], strides = [1, 1]} : vector<8x128xf32> to vector<8x32xf32>
    %175 = vector.extract_strided_slice %173 {offsets = [0, 32], sizes = [8, 32], strides = [1, 1]} : vector<8x128xf32> to vector<8x32xf32>
    %176 = vector.extract_strided_slice %173 {offsets = [0, 64], sizes = [8, 32], strides = [1, 1]} : vector<8x128xf32> to vector<8x32xf32>
    %cst_45 = arith.constant 2.000000e+00 : f32
    %177 = vector.broadcast %cst_45 : f32 to vector<8x32xf32>
    %178 = arith.mulf %177, %176 : vector<8x32xf32>
    %cst_46 = arith.constant 1.000000e+00 : f32
    %179 = vector.broadcast %cst_46 : f32 to vector<8x32xf32>
    %180 = arith.subf %178, %179 : vector<8x32xf32>
    %181 = vector.extract_strided_slice %173 {offsets = [0, 96], sizes = [8, 32], strides = [1, 1]} : vector<8x128xf32> to vector<8x32xf32>
    %182 = arith.mulf %175, %139 : vector<8x32xf32>
    %183 = arith.mulf %174, %180 : vector<8x32xf32>
    %184 = arith.addf %182, %183 : vector<8x32xf32>
    %185 = math.tanh %184 : vector<8x32xf32>
    %186 = arith.mulf %181, %185 : vector<8x32xf32>
    %c4 = arith.constant 4 : index
    %c0_47 = arith.constant 0 : index
    %c0_48 = arith.constant 0 : index
    %187 = vector.load %arg1[%c4, %c0_47, %c0_48] : memref<8x8x128xf32, #tpu.memory_space<vmem>>, vector<1x8x128xf32>
    %188 = vector.shape_cast %187 : vector<1x8x128xf32> to vector<8x128xf32>
    %189 = arith.addf %188, %164 : vector<8x128xf32>
    %190 = arith.negf %189 : vector<8x128xf32>
    %191 = math.exp %190 : vector<8x128xf32>
    %cst_49 = arith.constant 1.000000e+00 : f32
    %192 = vector.broadcast %cst_49 : f32 to vector<8x128xf32>
    %193 = arith.addf %192, %191 : vector<8x128xf32>
    %194 = arith.divf %192, %193 : vector<8x128xf32>
    %195 = vector.extract_strided_slice %194 {offsets = [0, 0], sizes = [8, 32], strides = [1, 1]} : vector<8x128xf32> to vector<8x32xf32>
    %196 = vector.extract_strided_slice %194 {offsets = [0, 32], sizes = [8, 32], strides = [1, 1]} : vector<8x128xf32> to vector<8x32xf32>
    %197 = vector.extract_strided_slice %194 {offsets = [0, 64], sizes = [8, 32], strides = [1, 1]} : vector<8x128xf32> to vector<8x32xf32>
    %cst_50 = arith.constant 2.000000e+00 : f32
    %198 = vector.broadcast %cst_50 : f32 to vector<8x32xf32>
    %199 = arith.mulf %198, %197 : vector<8x32xf32>
    %cst_51 = arith.constant 1.000000e+00 : f32
    %200 = vector.broadcast %cst_51 : f32 to vector<8x32xf32>
    %201 = arith.subf %199, %200 : vector<8x32xf32>
    %202 = vector.extract_strided_slice %194 {offsets = [0, 96], sizes = [8, 32], strides = [1, 1]} : vector<8x128xf32> to vector<8x32xf32>
    %203 = arith.mulf %196, %160 : vector<8x32xf32>
    %204 = arith.mulf %195, %201 : vector<8x32xf32>
    %205 = arith.addf %203, %204 : vector<8x32xf32>
    %206 = math.tanh %205 : vector<8x32xf32>
    %207 = arith.mulf %202, %206 : vector<8x32xf32>
    %cst_52 = arith.constant dense<0.000000e+00> : vector<8x256xf32>
    %208 = tpu.matmul %207, %0, %cst_52 {dimension_numbers = #tpu.dot_dimension_numbers<[1], [0], [0], [1], [0, 0, 1, 1], [], []>} : vector<8x32xf32>, vector<32x256xf32>, vector<8x256xf32> -> vector<8x256xf32>
    %209 = vector.extract_strided_slice %208 {offsets = [0, 0], sizes = [8, 128], strides = [1, 1]} : vector<8x256xf32> to vector<8x128xf32>
    %cst_53 = arith.constant dense<0.000000e+00> : vector<8x128xf32>
    %210 = tpu.matmul %186, %1, %cst_53 {dimension_numbers = #tpu.dot_dimension_numbers<[1], [0], [0], [1], [0, 0, 1, 1], [], []>} : vector<8x32xf32>, vector<32x128xf32>, vector<8x128xf32> -> vector<8x128xf32>
    %211 = vector.extract_strided_slice %208 {offsets = [0, 128], sizes = [8, 128], strides = [1, 1]} : vector<8x256xf32> to vector<8x128xf32>
    %212 = arith.addf %211, %210 : vector<8x128xf32>
    %213 = arith.addf %212, %4 : vector<8x128xf32>
    %214 = arith.negf %213 : vector<8x128xf32>
    %215 = math.exp %214 : vector<8x128xf32>
    %cst_54 = arith.constant 1.000000e+00 : f32
    %216 = vector.broadcast %cst_54 : f32 to vector<8x128xf32>
    %217 = arith.addf %216, %215 : vector<8x128xf32>
    %218 = arith.divf %216, %217 : vector<8x128xf32>
    %219 = vector.extract_strided_slice %218 {offsets = [0, 0], sizes = [8, 32], strides = [1, 1]} : vector<8x128xf32> to vector<8x32xf32>
    %220 = vector.extract_strided_slice %218 {offsets = [0, 32], sizes = [8, 32], strides = [1, 1]} : vector<8x128xf32> to vector<8x32xf32>
    %221 = vector.extract_strided_slice %218 {offsets = [0, 64], sizes = [8, 32], strides = [1, 1]} : vector<8x128xf32> to vector<8x32xf32>
    %cst_55 = arith.constant 2.000000e+00 : f32
    %222 = vector.broadcast %cst_55 : f32 to vector<8x32xf32>
    %223 = arith.mulf %222, %221 : vector<8x32xf32>
    %cst_56 = arith.constant 1.000000e+00 : f32
    %224 = vector.broadcast %cst_56 : f32 to vector<8x32xf32>
    %225 = arith.subf %223, %224 : vector<8x32xf32>
    %226 = vector.extract_strided_slice %218 {offsets = [0, 96], sizes = [8, 32], strides = [1, 1]} : vector<8x128xf32> to vector<8x32xf32>
    %227 = arith.mulf %220, %184 : vector<8x32xf32>
    %228 = arith.mulf %219, %225 : vector<8x32xf32>
    %229 = arith.addf %227, %228 : vector<8x32xf32>
    %230 = math.tanh %229 : vector<8x32xf32>
    %231 = arith.mulf %226, %230 : vector<8x32xf32>
    %c5 = arith.constant 5 : index
    %c0_57 = arith.constant 0 : index
    %c0_58 = arith.constant 0 : index
    %232 = vector.load %arg1[%c5, %c0_57, %c0_58] : memref<8x8x128xf32, #tpu.memory_space<vmem>>, vector<1x8x128xf32>
    %233 = vector.shape_cast %232 : vector<1x8x128xf32> to vector<8x128xf32>
    %234 = arith.addf %233, %209 : vector<8x128xf32>
    %235 = arith.negf %234 : vector<8x128xf32>
    %236 = math.exp %235 : vector<8x128xf32>
    %cst_59 = arith.constant 1.000000e+00 : f32
    %237 = vector.broadcast %cst_59 : f32 to vector<8x128xf32>
    %238 = arith.addf %237, %236 : vector<8x128xf32>
    %239 = arith.divf %237, %238 : vector<8x128xf32>
    %240 = vector.extract_strided_slice %239 {offsets = [0, 0], sizes = [8, 32], strides = [1, 1]} : vector<8x128xf32> to vector<8x32xf32>
    %241 = vector.extract_strided_slice %239 {offsets = [0, 32], sizes = [8, 32], strides = [1, 1]} : vector<8x128xf32> to vector<8x32xf32>
    %242 = vector.extract_strided_slice %239 {offsets = [0, 64], sizes = [8, 32], strides = [1, 1]} : vector<8x128xf32> to vector<8x32xf32>
    %cst_60 = arith.constant 2.000000e+00 : f32
    %243 = vector.broadcast %cst_60 : f32 to vector<8x32xf32>
    %244 = arith.mulf %243, %242 : vector<8x32xf32>
    %cst_61 = arith.constant 1.000000e+00 : f32
    %245 = vector.broadcast %cst_61 : f32 to vector<8x32xf32>
    %246 = arith.subf %244, %245 : vector<8x32xf32>
    %247 = vector.extract_strided_slice %239 {offsets = [0, 96], sizes = [8, 32], strides = [1, 1]} : vector<8x128xf32> to vector<8x32xf32>
    %248 = arith.mulf %241, %205 : vector<8x32xf32>
    %249 = arith.mulf %240, %246 : vector<8x32xf32>
    %250 = arith.addf %248, %249 : vector<8x32xf32>
    %251 = math.tanh %250 : vector<8x32xf32>
    %252 = arith.mulf %247, %251 : vector<8x32xf32>
    %cst_62 = arith.constant dense<0.000000e+00> : vector<8x256xf32>
    %253 = tpu.matmul %252, %0, %cst_62 {dimension_numbers = #tpu.dot_dimension_numbers<[1], [0], [0], [1], [0, 0, 1, 1], [], []>} : vector<8x32xf32>, vector<32x256xf32>, vector<8x256xf32> -> vector<8x256xf32>
    %254 = vector.extract_strided_slice %253 {offsets = [0, 0], sizes = [8, 128], strides = [1, 1]} : vector<8x256xf32> to vector<8x128xf32>
    %cst_63 = arith.constant dense<0.000000e+00> : vector<8x128xf32>
    %255 = tpu.matmul %231, %1, %cst_63 {dimension_numbers = #tpu.dot_dimension_numbers<[1], [0], [0], [1], [0, 0, 1, 1], [], []>} : vector<8x32xf32>, vector<32x128xf32>, vector<8x128xf32> -> vector<8x128xf32>
    %256 = vector.extract_strided_slice %253 {offsets = [0, 128], sizes = [8, 128], strides = [1, 1]} : vector<8x256xf32> to vector<8x128xf32>
    %257 = arith.addf %256, %255 : vector<8x128xf32>
    %258 = arith.addf %257, %4 : vector<8x128xf32>
    %259 = arith.negf %258 : vector<8x128xf32>
    %260 = math.exp %259 : vector<8x128xf32>
    %cst_64 = arith.constant 1.000000e+00 : f32
    %261 = vector.broadcast %cst_64 : f32 to vector<8x128xf32>
    %262 = arith.addf %261, %260 : vector<8x128xf32>
    %263 = arith.divf %261, %262 : vector<8x128xf32>
    %264 = vector.extract_strided_slice %263 {offsets = [0, 0], sizes = [8, 32], strides = [1, 1]} : vector<8x128xf32> to vector<8x32xf32>
    %265 = vector.extract_strided_slice %263 {offsets = [0, 32], sizes = [8, 32], strides = [1, 1]} : vector<8x128xf32> to vector<8x32xf32>
    %266 = vector.extract_strided_slice %263 {offsets = [0, 64], sizes = [8, 32], strides = [1, 1]} : vector<8x128xf32> to vector<8x32xf32>
    %cst_65 = arith.constant 2.000000e+00 : f32
    %267 = vector.broadcast %cst_65 : f32 to vector<8x32xf32>
    %268 = arith.mulf %267, %266 : vector<8x32xf32>
    %cst_66 = arith.constant 1.000000e+00 : f32
    %269 = vector.broadcast %cst_66 : f32 to vector<8x32xf32>
    %270 = arith.subf %268, %269 : vector<8x32xf32>
    %271 = vector.extract_strided_slice %263 {offsets = [0, 96], sizes = [8, 32], strides = [1, 1]} : vector<8x128xf32> to vector<8x32xf32>
    %272 = arith.mulf %265, %229 : vector<8x32xf32>
    %273 = arith.mulf %264, %270 : vector<8x32xf32>
    %274 = arith.addf %272, %273 : vector<8x32xf32>
    %275 = math.tanh %274 : vector<8x32xf32>
    %276 = arith.mulf %271, %275 : vector<8x32xf32>
    %c6 = arith.constant 6 : index
    %c0_67 = arith.constant 0 : index
    %c0_68 = arith.constant 0 : index
    %277 = vector.load %arg1[%c6, %c0_67, %c0_68] : memref<8x8x128xf32, #tpu.memory_space<vmem>>, vector<1x8x128xf32>
    %278 = vector.shape_cast %277 : vector<1x8x128xf32> to vector<8x128xf32>
    %279 = arith.addf %278, %254 : vector<8x128xf32>
    %280 = arith.negf %279 : vector<8x128xf32>
    %281 = math.exp %280 : vector<8x128xf32>
    %cst_69 = arith.constant 1.000000e+00 : f32
    %282 = vector.broadcast %cst_69 : f32 to vector<8x128xf32>
    %283 = arith.addf %282, %281 : vector<8x128xf32>
    %284 = arith.divf %282, %283 : vector<8x128xf32>
    %285 = vector.extract_strided_slice %284 {offsets = [0, 0], sizes = [8, 32], strides = [1, 1]} : vector<8x128xf32> to vector<8x32xf32>
    %286 = vector.extract_strided_slice %284 {offsets = [0, 32], sizes = [8, 32], strides = [1, 1]} : vector<8x128xf32> to vector<8x32xf32>
    %287 = vector.extract_strided_slice %284 {offsets = [0, 64], sizes = [8, 32], strides = [1, 1]} : vector<8x128xf32> to vector<8x32xf32>
    %cst_70 = arith.constant 2.000000e+00 : f32
    %288 = vector.broadcast %cst_70 : f32 to vector<8x32xf32>
    %289 = arith.mulf %288, %287 : vector<8x32xf32>
    %cst_71 = arith.constant 1.000000e+00 : f32
    %290 = vector.broadcast %cst_71 : f32 to vector<8x32xf32>
    %291 = arith.subf %289, %290 : vector<8x32xf32>
    %292 = vector.extract_strided_slice %284 {offsets = [0, 96], sizes = [8, 32], strides = [1, 1]} : vector<8x128xf32> to vector<8x32xf32>
    %293 = arith.mulf %286, %250 : vector<8x32xf32>
    %294 = arith.mulf %285, %291 : vector<8x32xf32>
    %295 = arith.addf %293, %294 : vector<8x32xf32>
    %296 = math.tanh %295 : vector<8x32xf32>
    %297 = arith.mulf %292, %296 : vector<8x32xf32>
    %cst_72 = arith.constant dense<0.000000e+00> : vector<8x256xf32>
    %298 = tpu.matmul %297, %0, %cst_72 {dimension_numbers = #tpu.dot_dimension_numbers<[1], [0], [0], [1], [0, 0, 1, 1], [], []>} : vector<8x32xf32>, vector<32x256xf32>, vector<8x256xf32> -> vector<8x256xf32>
    %299 = vector.extract_strided_slice %298 {offsets = [0, 0], sizes = [8, 128], strides = [1, 1]} : vector<8x256xf32> to vector<8x128xf32>
    %cst_73 = arith.constant dense<0.000000e+00> : vector<8x128xf32>
    %300 = tpu.matmul %276, %1, %cst_73 {dimension_numbers = #tpu.dot_dimension_numbers<[1], [0], [0], [1], [0, 0, 1, 1], [], []>} : vector<8x32xf32>, vector<32x128xf32>, vector<8x128xf32> -> vector<8x128xf32>
    %301 = vector.extract_strided_slice %298 {offsets = [0, 128], sizes = [8, 128], strides = [1, 1]} : vector<8x256xf32> to vector<8x128xf32>
    %302 = arith.addf %301, %300 : vector<8x128xf32>
    %303 = arith.addf %302, %4 : vector<8x128xf32>
    %304 = arith.negf %303 : vector<8x128xf32>
    %305 = math.exp %304 : vector<8x128xf32>
    %cst_74 = arith.constant 1.000000e+00 : f32
    %306 = vector.broadcast %cst_74 : f32 to vector<8x128xf32>
    %307 = arith.addf %306, %305 : vector<8x128xf32>
    %308 = arith.divf %306, %307 : vector<8x128xf32>
    %309 = vector.extract_strided_slice %308 {offsets = [0, 0], sizes = [8, 32], strides = [1, 1]} : vector<8x128xf32> to vector<8x32xf32>
    %310 = vector.extract_strided_slice %308 {offsets = [0, 32], sizes = [8, 32], strides = [1, 1]} : vector<8x128xf32> to vector<8x32xf32>
    %311 = vector.extract_strided_slice %308 {offsets = [0, 64], sizes = [8, 32], strides = [1, 1]} : vector<8x128xf32> to vector<8x32xf32>
    %cst_75 = arith.constant 2.000000e+00 : f32
    %312 = vector.broadcast %cst_75 : f32 to vector<8x32xf32>
    %313 = arith.mulf %312, %311 : vector<8x32xf32>
    %cst_76 = arith.constant 1.000000e+00 : f32
    %314 = vector.broadcast %cst_76 : f32 to vector<8x32xf32>
    %315 = arith.subf %313, %314 : vector<8x32xf32>
    %316 = vector.extract_strided_slice %308 {offsets = [0, 96], sizes = [8, 32], strides = [1, 1]} : vector<8x128xf32> to vector<8x32xf32>
    %317 = arith.mulf %310, %274 : vector<8x32xf32>
    %318 = arith.mulf %309, %315 : vector<8x32xf32>
    %319 = arith.addf %317, %318 : vector<8x32xf32>
    %320 = math.tanh %319 : vector<8x32xf32>
    %321 = arith.mulf %316, %320 : vector<8x32xf32>
    %c7 = arith.constant 7 : index
    %c0_77 = arith.constant 0 : index
    %c0_78 = arith.constant 0 : index
    %322 = vector.load %arg1[%c7, %c0_77, %c0_78] : memref<8x8x128xf32, #tpu.memory_space<vmem>>, vector<1x8x128xf32>
    %323 = vector.shape_cast %322 : vector<1x8x128xf32> to vector<8x128xf32>
    %324 = arith.addf %323, %299 : vector<8x128xf32>
    %325 = arith.negf %324 : vector<8x128xf32>
    %326 = math.exp %325 : vector<8x128xf32>
    %cst_79 = arith.constant 1.000000e+00 : f32
    %327 = vector.broadcast %cst_79 : f32 to vector<8x128xf32>
    %328 = arith.addf %327, %326 : vector<8x128xf32>
    %329 = arith.divf %327, %328 : vector<8x128xf32>
    %330 = vector.extract_strided_slice %329 {offsets = [0, 0], sizes = [8, 32], strides = [1, 1]} : vector<8x128xf32> to vector<8x32xf32>
    %331 = vector.extract_strided_slice %329 {offsets = [0, 32], sizes = [8, 32], strides = [1, 1]} : vector<8x128xf32> to vector<8x32xf32>
    %332 = vector.extract_strided_slice %329 {offsets = [0, 64], sizes = [8, 32], strides = [1, 1]} : vector<8x128xf32> to vector<8x32xf32>
    %cst_80 = arith.constant 2.000000e+00 : f32
    %333 = vector.broadcast %cst_80 : f32 to vector<8x32xf32>
    %334 = arith.mulf %333, %332 : vector<8x32xf32>
    %cst_81 = arith.constant 1.000000e+00 : f32
    %335 = vector.broadcast %cst_81 : f32 to vector<8x32xf32>
    %336 = arith.subf %334, %335 : vector<8x32xf32>
    %337 = vector.extract_strided_slice %329 {offsets = [0, 96], sizes = [8, 32], strides = [1, 1]} : vector<8x128xf32> to vector<8x32xf32>
    %338 = arith.mulf %331, %295 : vector<8x32xf32>
    %339 = arith.mulf %330, %336 : vector<8x32xf32>
    %340 = arith.addf %338, %339 : vector<8x32xf32>
    %341 = math.tanh %340 : vector<8x32xf32>
    %342 = arith.mulf %337, %341 : vector<8x32xf32>
    %cst_82 = arith.constant dense<0.000000e+00> : vector<8x256xf32>
    %343 = tpu.matmul %342, %0, %cst_82 {dimension_numbers = #tpu.dot_dimension_numbers<[1], [0], [0], [1], [0, 0, 1, 1], [], []>} : vector<8x32xf32>, vector<32x256xf32>, vector<8x256xf32> -> vector<8x256xf32>
    %cst_83 = arith.constant dense<0.000000e+00> : vector<8x128xf32>
    %344 = tpu.matmul %321, %1, %cst_83 {dimension_numbers = #tpu.dot_dimension_numbers<[1], [0], [0], [1], [0, 0, 1, 1], [], []>} : vector<8x32xf32>, vector<32x128xf32>, vector<8x128xf32> -> vector<8x128xf32>
    %345 = vector.extract_strided_slice %343 {offsets = [0, 128], sizes = [8, 128], strides = [1, 1]} : vector<8x256xf32> to vector<8x128xf32>
    %346 = arith.addf %345, %344 : vector<8x128xf32>
    %347 = arith.addf %346, %4 : vector<8x128xf32>
    %348 = arith.negf %347 : vector<8x128xf32>
    %349 = math.exp %348 : vector<8x128xf32>
    %cst_84 = arith.constant 1.000000e+00 : f32
    %350 = vector.broadcast %cst_84 : f32 to vector<8x128xf32>
    %351 = arith.addf %350, %349 : vector<8x128xf32>
    %352 = arith.divf %350, %351 : vector<8x128xf32>
    %353 = vector.extract_strided_slice %352 {offsets = [0, 0], sizes = [8, 32], strides = [1, 1]} : vector<8x128xf32> to vector<8x32xf32>
    %354 = vector.extract_strided_slice %352 {offsets = [0, 32], sizes = [8, 32], strides = [1, 1]} : vector<8x128xf32> to vector<8x32xf32>
    %355 = vector.extract_strided_slice %352 {offsets = [0, 64], sizes = [8, 32], strides = [1, 1]} : vector<8x128xf32> to vector<8x32xf32>
    %cst_85 = arith.constant 2.000000e+00 : f32
    %356 = vector.broadcast %cst_85 : f32 to vector<8x32xf32>
    %357 = arith.mulf %356, %355 : vector<8x32xf32>
    %cst_86 = arith.constant 1.000000e+00 : f32
    %358 = vector.broadcast %cst_86 : f32 to vector<8x32xf32>
    %359 = arith.subf %357, %358 : vector<8x32xf32>
    %360 = vector.extract_strided_slice %352 {offsets = [0, 96], sizes = [8, 32], strides = [1, 1]} : vector<8x128xf32> to vector<8x32xf32>
    %361 = arith.mulf %354, %319 : vector<8x32xf32>
    %362 = arith.mulf %353, %359 : vector<8x32xf32>
    %363 = arith.addf %361, %362 : vector<8x32xf32>
    %364 = math.tanh %363 : vector<8x32xf32>
    %365 = arith.mulf %360, %364 : vector<8x32xf32>
    %c0_87 = arith.constant 0 : index
    %c0_88 = arith.constant 0 : index
    %366 = vector.load %arg5[%c0_87, %c0_88] : memref<32x128xf32, #tpu.memory_space<vmem>>, vector<32x128xf32>
    %cst_89 = arith.constant dense<0.000000e+00> : vector<8x128xf32>
    %367 = tpu.matmul %365, %366, %cst_89 {dimension_numbers = #tpu.dot_dimension_numbers<[1], [0], [0], [1], [0, 0, 1, 1], [], []>} : vector<8x32xf32>, vector<32x128xf32>, vector<8x128xf32> -> vector<8x128xf32>
    %c0_90 = arith.constant 0 : index
    %c0_91 = arith.constant 0 : index
    %368 = vector.load %arg6[%c0_90, %c0_91] : memref<1x128xf32, #tpu.memory_space<vmem>>, vector<1x128xf32>
    %369 = vector.broadcast %368 : vector<1x128xf32> to vector<8x128xf32>
    %370 = arith.addf %367, %369 : vector<8x128xf32>
    %c0_92 = arith.constant 0 : index
    %c0_93 = arith.constant 0 : index
    %371 = vector.load %arg7[%c0_92, %c0_93] : memref<8x128xf32, #tpu.memory_space<vmem>>, vector<8x128xf32>
    tpu.vector_store %arg7[%c0_92, %c0_93], %370 {strides = array<i32>} : memref<8x128xf32, #tpu.memory_space<vmem>>, vector<8x128xf32>,
    return
  }
  func.func @transform_0(%arg0: i32) -> (i32, i32, i32) {
    %c0_i32 = arith.constant 0 : i32
    %c0_i32_0 = arith.constant 0 : i32
    %c0_i32_1 = arith.constant 0 : i32
    return %c0_i32, %arg0, %c0_i32_0 : i32, i32, i32
  }
  func.func @transform_1(%arg0: i32) -> (i32, i32) {
    %c0_i32 = arith.constant 0 : i32
    %c0_i32_0 = arith.constant 0 : i32
    %c0_i32_1 = arith.constant 0 : i32
    return %c0_i32, %c0_i32_0 : i32, i32
  }
  func.func @transform_2(%arg0: i32) -> (i32, i32) {
    %c0_i32 = arith.constant 0 : i32
    %c0_i32_0 = arith.constant 0 : i32
    %c0_i32_1 = arith.constant 0 : i32
    return %c0_i32, %c0_i32_0 : i32, i32
  }
  func.func @transform_3(%arg0: i32) -> (i32, i32) {
    %c0_i32 = arith.constant 0 : i32
    %c0_i32_0 = arith.constant 0 : i32
    %c0_i32_1 = arith.constant 0 : i32
    return %c0_i32, %c0_i32_0 : i32, i32
  }
  func.func @transform_4(%arg0: i32) -> (i32, i32) {
    %c0_i32 = arith.constant 0 : i32
    %c0_i32_0 = arith.constant 0 : i32
    %c0_i32_1 = arith.constant 0 : i32
    return %c0_i32, %c0_i32_0 : i32, i32
  }
  func.func @transform_5(%arg0: i32) -> (i32, i32) {
    %c0_i32 = arith.constant 0 : i32
    %c0_i32_0 = arith.constant 0 : i32
    %c0_i32_1 = arith.constant 0 : i32
    return %c0_i32, %c0_i32_0 : i32, i32
  }
  func.func @transform_6(%arg0: i32) -> (i32, i32) {
    %c0_i32 = arith.constant 0 : i32
    %c0_i32_0 = arith.constant 0 : i32
    return %arg0, %c0_i32 : i32, i32
  }
}

</mosaic_0001>

<llo_original>
// kernel: _lstm_model_forward.1
$region0: #{_lstm_model_forward.1}
  #allocation0 [shape = 'u32[]', space=smem, size = 0x4, offset = 0x4, fixed_abs, tag = 'smem constant byte address 0x4 - core index']
  #allocation1 [shape = 'u32[144,128]{1,0:T(1,128)}', space=vmem, size = 0x12000, scoped, tag = 'internal scratch']
  %s0 = inlined_call_operand.vmem [shape: f32[8,8,128], index: 0, kind: input, shape index: {}]
  %s1 = inlined_call_operand.vmem [shape: f32[32,256], index: 1, kind: input, shape index: {}]
  %s2 = inlined_call_operand.vmem [shape: f32[32,128], index: 2, kind: input, shape index: {}]
  %s3 = inlined_call_operand.vmem [shape: f32[1,128], index: 3, kind: input, shape index: {}]
  %s4 = inlined_call_operand.vmem [shape: f32[32,128], index: 4, kind: input, shape index: {}]
  %s5 = inlined_call_operand.vmem [shape: f32[1,128], index: 5, kind: input, shape index: {}]
  %s6 = inlined_call_operand.vmem [shape: f32[8,128], index: 6, kind: output, shape index: {}]
  %s7 = sld [smem:[#allocation0]]
  $region34: #{_lstm_model_forward.1} parent=0
    _
  %s9 = ssub.s32 1, %s7
  %s10 = scalar_select 0, %s9, %s7
  // Predicated region
  $region2: #{_lstm_model_forward.1} parent=0 // pred_check
    _
  $region3: #{_lstm_model_forward.1} parent=0 // pred_check_branch
    %12 = sbr.rel (0) target = $region5
  $region4: #{_lstm_model_forward.1} parent=0 // pred_region
    _
  $region5: #{_lstm_model_forward.1} parent=0 // pred_fallthru
    _
  // Predicated region
  $region6: #{_lstm_model_forward.1} parent=0 // pred_check
    _
  $region7: #{_lstm_model_forward.1} parent=0 // pred_check_branch
    %14 = sbr.rel (0) target = $region9
  $region8: #{_lstm_model_forward.1} parent=0 // pred_region
    _
  $region9: #{_lstm_model_forward.1} parent=0 // pred_fallthru
    _
  // Predicated region
  $region10: #{_lstm_model_forward.1} parent=0 // pred_check
    _
  $region11: #{_lstm_model_forward.1} parent=0 // pred_check_branch
    %16 = sbr.rel (0) target = $region13
  $region12: #{_lstm_model_forward.1} parent=0 // pred_region
    _
  $region13: #{_lstm_model_forward.1} parent=0 // pred_fallthru
    _
  // Predicated region
  $region14: #{_lstm_model_forward.1} parent=0 // pred_check
    _
  $region15: #{_lstm_model_forward.1} parent=0 // pred_check_branch
    %18 = sbr.rel (0) target = $region17
  $region16: #{_lstm_model_forward.1} parent=0 // pred_region
    _
  $region17: #{_lstm_model_forward.1} parent=0 // pred_fallthru
    _
  // Predicated region
  $region18: #{_lstm_model_forward.1} parent=0 // pred_check
    _
  $region19: #{_lstm_model_forward.1} parent=0 // pred_check_branch
    %20 = sbr.rel (0) target = $region21
  $region20: #{_lstm_model_forward.1} parent=0 // pred_region
    _
  $region21: #{_lstm_model_forward.1} parent=0 // pred_fallthru
    _
  // Predicated region
  $region22: #{_lstm_model_forward.1} parent=0 // pred_check
    _
  $region23: #{_lstm_model_forward.1} parent=0 // pred_check_branch
    %22 = sbr.rel (0) target = $region25
  $region24: #{_lstm_model_forward.1} parent=0 // pred_region
    _
  $region25: #{_lstm_model_forward.1} parent=0 // pred_fallthru
    _
  %v23 = vld [vmem:[%s1] sm:$0xff]
  %v24 = vld [vmem:[%s1 + $0x8] sm:$0xff]
  %v25 = vld [vmem:[%s1 + $0x10] sm:$0xff]
  %v26 = vld [vmem:[%s1 + $0x18] sm:$0xff]
  %v27 = vld [vmem:[%s1 + $0x20] sm:$0xff]
  %v28 = vld [vmem:[%s1 + $0x28] sm:$0xff]
  %v29 = vld [vmem:[%s1 + $0x30] sm:$0xff]
  %v30 = vld [vmem:[%s1 + $0x38] sm:$0xff]
  %v31 = vld [vmem:[%s2] sm:$0xff]
  %v32 = vld [vmem:[%s2 + $0x8] sm:$0xff]
  %v33 = vld [vmem:[%s2 + $0x10] sm:$0xff]
  %v34 = vld [vmem:[%s2 + $0x18] sm:$0xff]
  %v35 = vld [vmem:[%s3] sm:$0x1]
  %v37 = vlaneseq
  %v38 = vshrl.u32 %v37, 7
  %v39 = vsub.s32 0, %v38
  %v40 = vrot.slane %v35, %v39
  %v42 = vld [vmem:[%s0] sm:$0xff]
  %v43 = vadd.f32 %v42, 0.0
  %v44 = vxor.u32 %v43, 2147483648
  %v45 = vmul.f32 %v44, 1.442695
  %v46 = vpow.pop %v45
  %v47 = vadd.f32 %v46, 1.0
  %v48 = vrcp.pop %v47
  %v49 = vmul.f32 1.0, %v48
  %v50 = vmul.f32 %v49, 2.0
  %v51 = vsub.f32 %v50, 1.0
  %v52 = vmul.f32 %v49, 0.0
  %54 = vrot.lane.b32.xlu0 %v51, 64
  %v55 = vpop.permute.xlu0 %54
  %v57 = vmul.f32 %v49, %v55
  %59 = vrot.lane.b32.xlu0 %v57, 32
  %v60 = vpop.permute.xlu0 %59
  %v62 = vadd.f32 %v52, %v60
  %v63 = vtanh.pop %v62
  %65 = vrot.lane.b32.xlu0 %v63, 64
  %v66 = vpop.permute.xlu0 %65
  %v68 = vmul.f32 %v49, %v66
  %70 = vrot.lane.b32.xlu0 %v68, 32
  %v71 = vpop.permute.xlu0 %70
  %vm72 = vcmask 261120
  %v73 = vsel %vm72, %v71, 0
  %75 = vmatprep.subr.mxu0 %v24
  %76 = vmatpush1.msra.mxu0 %v23
  %77 = vmatprep.subr.mxu0 %v26
  %78 = vmatpush1.msra.mxu0 %v25
  %79 = vmatprep.subr.mxu0 %v28
  %80 = vmatpush1.msra.mxu0 %v27
  %81 = vmatprep.subr.mxu0 %v30
  %82 = vmatpush1.msra.mxu0 %v29
  %83 = vmatprep.subr.mxu0 0.0
  %84 = vmatpush1.msra.mxu0 0.0
  %85 = vmatprep.subr.mxu0 0.0
  %86 = vmatpush1.msra.mxu0 0.0
  %87 = vmatprep.subr.mxu0 0.0
  %88 = vmatpush1.msra.mxu0 0.0
  %89 = vmatprep.subr.mxu0 0.0
  %90 = vmatpush1.msra.mxu0 0.0
  %91 = vmatprep.subr.mxu0 0.0
  %92 = vmatpush1.msra.mxu0 0.0
  %93 = vmatprep.subr.mxu0 0.0
  %94 = vmatpush1.msra.mxu0 0.0
  %95 = vmatprep.subr.mxu0 0.0
  %96 = vmatpush1.msra.mxu0 0.0
  %97 = vmatprep.subr.mxu0 0.0
  %98 = vmatpush1.msra.mxu0 0.0
  %99 = vmatprep.subr.mxu0 0.0
  %100 = vmatpush1.msra.mxu0 0.0
  %101 = vmatprep.subr.mxu0 0.0
  %102 = vmatpush1.msra.mxu0 0.0
  %103 = vmatprep.subr.mxu0 0.0
  %104 = vmatpush1.msra.mxu0 0.0
  %105 = vmatprep.subr.mxu0 0.0
  %106 = vmatpush1.msra.mxu0 0.0
  %107 = vmatprep.subr.mxu0 0.0
  %108 = vmatpush1.msra.mxu0 0.0
  %109 = vmatprep.subr.mxu0 0.0
  %110 = vmatpush1.msra.mxu0 0.0
  %111 = vmatprep.subr.mxu0 0.0
  %112 = vmatpush1.msra.mxu0 0.0
  %113 = vmatprep.subr.mxu0 0.0
  %114 = vmatpush1.msra.mxu0 0.0
  %115 = vmatprep.subr.mxu0 0.0
  %116 = vmatpush1.msra.mxu0 0.0
  %117 = vmatprep.subr.mxu0 0.0
  %118 = vmatpush1.msra.mxu0 0.0
  %119 = vmatprep.subr.mxu0 0.0
  %120 = vmatpush1.msra.mxu0 0.0
  %121 = vmatprep.subr.mxu0 0.0
  %122 = vmatpush1.msra.mxu0 0.0
  %123 = vmatprep.subr.mxu0 0.0
  %124 = vmatpush1.msra.mxu0 0.0
  %125 = vmatprep.subr.mxu0 0.0
  %126 = vmatpush1.msra.mxu0 0.0
  %127 = vmatprep.subr.mxu0 0.0
  %128 = vmatpush1.msra.mxu0 0.0
  %129 = vmatprep.subr.mxu0 0.0
  %130 = vmatpush1.msra.mxu0 0.0
  %131 = vmatprep.subr.mxu0 0.0
  %132 = vmatpush1.msra.mxu0 0.0
  %133 = vmatprep.subr.mxu0 0.0
  %134 = vmatpush1.msra.mxu0 0.0
  %135 = vmatprep.subr.mxu0 0.0
  %136 = vmatpush1.msra.mxu0 0.0
  %137 = vmatprep.subr.mxu0 0.0
  %138 = vmatpush1.msra.mxu0 0.0
  %139 = vmatprep.mubr.f32.mxu0 0.0
  %140 = vmatmul.mubr.f32.gmra.mrb[0].mxu0 %v73
  %v141 = vpop.f32.mrb[0].mxu0
  %v142 = vadd.f32 0.0, %v141
  %v143 = vpop.f32.mrb[0].mxu0
  %v144 = vadd.f32 0.0, %v143
  %145 = vdwg.mxu0
  %v147 = vsel %vm72, 0.0, 0
  %149 = vmatprep.subr.mxu0 0.0
  %150 = vmatpush1.msra.mxu0 %v31
  %151 = vmatprep.subr.mxu0 0.0
  %152 = vmatpush1.msra.mxu0 %v32
  %153 = vmatprep.subr.mxu0 0.0
  %154 = vmatpush1.msra.mxu0 %v33
  %155 = vmatprep.subr.mxu0 0.0
  %156 = vmatpush1.msra.mxu0 %v34
  %157 = vmatprep.subr.mxu0 0.0
  %158 = vmatpush1.msra.mxu0 0.0
  %159 = vmatprep.subr.mxu0 0.0
  %160 = vmatpush1.msra.mxu0 0.0
  %161 = vmatprep.subr.mxu0 0.0
  %162 = vmatpush1.msra.mxu0 0.0
  %163 = vmatprep.subr.mxu0 0.0
  %164 = vmatpush1.msra.mxu0 0.0
  %165 = vmatprep.subr.mxu0 0.0
  %166 = vmatpush1.msra.mxu0 0.0
  %167 = vmatprep.subr.mxu0 0.0
  %168 = vmatpush1.msra.mxu0 0.0
  %169 = vmatprep.subr.mxu0 0.0
  %170 = vmatpush1.msra.mxu0 0.0
  %171 = vmatprep.subr.mxu0 0.0
  %172 = vmatpush1.msra.mxu0 0.0
  %173 = vmatprep.subr.mxu0 0.0
  %174 = vmatpush1.msra.mxu0 0.0
  %175 = vmatprep.subr.mxu0 0.0
  %176 = vmatpush1.msra.mxu0 0.0
  %177 = vmatprep.subr.mxu0 0.0
  %178 = vmatpush1.msra.mxu0 0.0
  %179 = vmatprep.subr.mxu0 0.0
  %180 = vmatpush1.msra.mxu0 0.0
  %181 = vmatprep.subr.mxu0 0.0
  %182 = vmatpush1.msra.mxu0 0.0
  %183 = vmatprep.subr.mxu0 0.0
  %184 = vmatpush1.msra.mxu0 0.0
  %185 = vmatprep.subr.mxu0 0.0
  %186 = vmatpush1.msra.mxu0 0.0
  %187 = vmatprep.subr.mxu0 0.0
  %188 = vmatpush1.msra.mxu0 0.0
  %189 = vmatprep.subr.mxu0 0.0
  %190 = vmatpush1.msra.mxu0 0.0
  %191 = vmatprep.subr.mxu0 0.0
  %192 = vmatpush1.msra.mxu0 0.0
  %193 = vmatprep.subr.mxu0 0.0
  %194 = vmatpush1.msra.mxu0 0.0
  %195 = vmatprep.subr.mxu0 0.0
  %196 = vmatpush1.msra.mxu0 0.0
  %197 = vmatprep.subr.mxu0 0.0
  %198 = vmatpush1.msra.mxu0 0.0
  %199 = vmatprep.subr.mxu0 0.0
  %200 = vmatpush1.msra.mxu0 0.0
  %201 = vmatprep.subr.mxu0 0.0
  %202 = vmatpush1.msra.mxu0 0.0
  %203 = vmatprep.subr.mxu0 0.0
  %204 = vmatpush1.msra.mxu0 0.0
  %205 = vmatprep.subr.mxu0 0.0
  %206 = vmatpush1.msra.mxu0 0.0
  %207 = vmatprep.subr.mxu0 0.0
  %208 = vmatpush1.msra.mxu0 0.0
  %209 = vmatprep.subr.mxu0 0.0
  %210 = vmatpush1.msra.mxu0 0.0
  %211 = vmatprep.subr.mxu0 0.0
  %212 = vmatpush1.msra.mxu0 0.0
  %213 = vmatprep.mubr.f32.mxu0 0.0
  %214 = vmatmul.mubr.f32.gmra.mrb[0].mxu0 %v147
  %v215 = vpop.f32.mrb[0].mxu0
  %v216 = vadd.f32 0.0, %v215
  %v217 = vpop.f32.mrb[0].mxu0
  %218 = vdwg.mxu0
  %v219 = vadd.f32 %v144, %v216
  %v220 = vadd.f32 %v219, %v40
  %v221 = vxor.u32 %v220, 2147483648
  %v222 = vmul.f32 %v221, 1.442695
  %v223 = vpow.pop %v222
  %v224 = vadd.f32 %v223, 1.0
  %v225 = vrcp.pop %v224
  %v226 = vmul.f32 1.0, %v225
  %v227 = vmul.f32 %v226, 2.0
  %v228 = vsub.f32 %v227, 1.0
  %v229 = vmul.f32 %v226, 0.0
  %231 = vrot.lane.b32.xlu0 %v228, 64
  %v232 = vpop.permute.xlu0 %231
  %v234 = vmul.f32 %v226, %v232
  %236 = vrot.lane.b32.xlu0 %v234, 32
  %v237 = vpop.permute.xlu0 %236
  %v239 = vadd.f32 %v229, %v237
  %v240 = vtanh.pop %v239
  %242 = vrot.lane.b32.xlu0 %v240, 64
  %v243 = vpop.permute.xlu0 %242
  %v245 = vmul.f32 %v226, %v243
  %s246 = scalar_lea.vmem %s0, 8
  %v247 = vld [vmem:[%s246] sm:$0xff]
  %v248 = vadd.f32 %v247, %v142
  %v249 = vxor.u32 %v248, 2147483648
  %v250 = vmul.f32 %v249, 1.442695
  %v251 = vpow.pop %v250
  %v252 = vadd.f32 %v251, 1.0
  %v253 = vrcp.pop %v252
  %v254 = vmul.f32 1.0, %v253
  %v255 = vmul.f32 %v254, 2.0
  %v256 = vsub.f32 %v255, 1.0
  %v257 = vmul.f32 %v254, %v62
  %259 = vrot.lane.b32.xlu0 %v256, 64
  %v260 = vpop.permute.xlu0 %259
  %v262 = vmul.f32 %v254, %v260
  %264 = vrot.lane.b32.xlu0 %v262, 32
  %v265 = vpop.permute.xlu0 %264
  %v267 = vadd.f32 %v257, %v265
  %v268 = vtanh.pop %v267
  %270 = vrot.lane.b32.xlu0 %v268, 64
  %v271 = vpop.permute.xlu0 %270
  %v273 = vmul.f32 %v254, %v271
  %275 = vrot.lane.b32.xlu0 %v273, 32
  %v276 = vpop.permute.xlu0 %275
  %v277 = vsel %vm72, %v276, 0
  %279 = vmatprep.subr.mxu0 %v24
  %280 = vmatpush1.msra.mxu0 %v23
  %281 = vmatprep.subr.mxu0 %v26
  %282 = vmatpush1.msra.mxu0 %v25
  %283 = vmatprep.subr.mxu0 %v28
  %284 = vmatpush1.msra.mxu0 %v27
  %285 = vmatprep.subr.mxu0 %v30
  %286 = vmatpush1.msra.mxu0 %v29
  %287 = vmatprep.subr.mxu0 0.0
  %288 = vmatpush1.msra.mxu0 0.0
  %289 = vmatprep.subr.mxu0 0.0
  %290 = vmatpush1.msra.mxu0 0.0
  %291 = vmatprep.subr.mxu0 0.0
  %292 = vmatpush1.msra.mxu0 0.0
  %293 = vmatprep.subr.mxu0 0.0
  %294 = vmatpush1.msra.mxu0 0.0
  %295 = vmatprep.subr.mxu0 0.0
  %296 = vmatpush1.msra.mxu0 0.0
  %297 = vmatprep.subr.mxu0 0.0
  %298 = vmatpush1.msra.mxu0 0.0
  %299 = vmatprep.subr.mxu0 0.0
  %300 = vmatpush1.msra.mxu0 0.0
  %301 = vmatprep.subr.mxu0 0.0
  %302 = vmatpush1.msra.mxu0 0.0
  %303 = vmatprep.subr.mxu0 0.0
  %304 = vmatpush1.msra.mxu0 0.0
  %305 = vmatprep.subr.mxu0 0.0
  %306 = vmatpush1.msra.mxu0 0.0
  %307 = vmatprep.subr.mxu0 0.0
  %308 = vmatpush1.msra.mxu0 0.0
  %309 = vmatprep.subr.mxu0 0.0
  %310 = vmatpush1.msra.mxu0 0.0
  %311 = vmatprep.subr.mxu0 0.0
  %312 = vmatpush1.msra.mxu0 0.0
  %313 = vmatprep.subr.mxu0 0.0
  %314 = vmatpush1.msra.mxu0 0.0
  %315 = vmatprep.subr.mxu0 0.0
  %316 = vmatpush1.msra.mxu0 0.0
  %317 = vmatprep.subr.mxu0 0.0
  %318 = vmatpush1.msra.mxu0 0.0
  %319 = vmatprep.subr.mxu0 0.0
  %320 = vmatpush1.msra.mxu0 0.0
  %321 = vmatprep.subr.mxu0 0.0
  %322 = vmatpush1.msra.mxu0 0.0
  %323 = vmatprep.subr.mxu0 0.0
  %324 = vmatpush1.msra.mxu0 0.0
  %325 = vmatprep.subr.mxu0 0.0
  %326 = vmatpush1.msra.mxu0 0.0
  %327 = vmatprep.subr.mxu0 0.0
  %328 = vmatpush1.msra.mxu0 0.0
  %329 = vmatprep.subr.mxu0 0.0
  %330 = vmatpush1.msra.mxu0 0.0
  %331 = vmatprep.subr.mxu0 0.0
  %332 = vmatpush1.msra.mxu0 0.0
  %333 = vmatprep.subr.mxu0 0.0
  %334 = vmatpush1.msra.mxu0 0.0
  %335 = vmatprep.subr.mxu0 0.0
  %336 = vmatpush1.msra.mxu0 0.0
  %337 = vmatprep.subr.mxu0 0.0
  %338 = vmatpush1.msra.mxu0 0.0
  %339 = vmatprep.subr.mxu0 0.0
  %340 = vmatpush1.msra.mxu0 0.0
  %341 = vmatprep.subr.mxu0 0.0
  %342 = vmatpush1.msra.mxu0 0.0
  %343 = vmatprep.mubr.f32.mxu0 0.0
  %344 = vmatmul.mubr.f32.gmra.mrb[0].mxu0 %v277
  %v345 = vpop.f32.mrb[0].mxu0
  %v346 = vadd.f32 0.0, %v345
  %v347 = vpop.f32.mrb[0].mxu0
  %v348 = vadd.f32 0.0, %v347
  %349 = vdwg.mxu0
  %351 = vrot.lane.b32.xlu0 %v245, 32
  %v352 = vpop.permute.xlu0 %351
  %v353 = vsel %vm72, %v352, 0
  %355 = vmatprep.subr.mxu0 0.0
  %356 = vmatpush1.msra.mxu0 %v31
  %357 = vmatprep.subr.mxu0 0.0
  %358 = vmatpush1.msra.mxu0 %v32
  %359 = vmatprep.subr.mxu0 0.0
  %360 = vmatpush1.msra.mxu0 %v33
  %361 = vmatprep.subr.mxu0 0.0
  %362 = vmatpush1.msra.mxu0 %v34
  %363 = vmatprep.subr.mxu0 0.0
  %364 = vmatpush1.msra.mxu0 0.0
  %365 = vmatprep.subr.mxu0 0.0
  %366 = vmatpush1.msra.mxu0 0.0
  %367 = vmatprep.subr.mxu0 0.0
  %368 = vmatpush1.msra.mxu0 0.0
  %369 = vmatprep.subr.mxu0 0.0
  %370 = vmatpush1.msra.mxu0 0.0
  %371 = vmatprep.subr.mxu0 0.0
  %372 = vmatpush1.msra.mxu0 0.0
  %373 = vmatprep.subr.mxu0 0.0
  %374 = vmatpush1.msra.mxu0 0.0
  %375 = vmatprep.subr.mxu0 0.0
  %376 = vmatpush1.msra.mxu0 0.0
  %377 = vmatprep.subr.mxu0 0.0
  %378 = vmatpush1.msra.mxu0 0.0
  %379 = vmatprep.subr.mxu0 0.0
  %380 = vmatpush1.msra.mxu0 0.0
  %381 = vmatprep.subr.mxu0 0.0
  %382 = vmatpush1.msra.mxu0 0.0
  %383 = vmatprep.subr.mxu0 0.0
  %384 = vmatpush1.msra.mxu0 0.0
  %385 = vmatprep.subr.mxu0 0.0
  %386 = vmatpush1.msra.mxu0 0.0
  %387 = vmatprep.subr.mxu0 0.0
  %388 = vmatpush1.msra.mxu0 0.0
  %389 = vmatprep.subr.mxu0 0.0
  %390 = vmatpush1.msra.mxu0 0.0
  %391 = vmatprep.subr.mxu0 0.0
  %392 = vmatpush1.msra.mxu0 0.0
  %393 = vmatprep.subr.mxu0 0.0
  %394 = vmatpush1.msra.mxu0 0.0
  %395 = vmatprep.subr.mxu0 0.0
  %396 = vmatpush1.msra.mxu0 0.0
  %397 = vmatprep.subr.mxu0 0.0
  %398 = vmatpush1.msra.mxu0 0.0
  %399 = vmatprep.subr.mxu0 0.0
  %400 = vmatpush1.msra.mxu0 0.0
  %401 = vmatprep.subr.mxu0 0.0
  %402 = vmatpush1.msra.mxu0 0.0
  %403 = vmatprep.subr.mxu0 0.0
  %404 = vmatpush1.msra.mxu0 0.0
  %405 = vmatprep.subr.mxu0 0.0
  %406 = vmatpush1.msra.mxu0 0.0
  %407 = vmatprep.subr.mxu0 0.0
  %408 = vmatpush1.msra.mxu0 0.0
  %409 = vmatprep.subr.mxu0 0.0
  %410 = vmatpush1.msra.mxu0 0.0
  %411 = vmatprep.subr.mxu0 0.0
  %412 = vmatpush1.msra.mxu0 0.0
  %413 = vmatprep.subr.mxu0 0.0
  %414 = vmatpush1.msra.mxu0 0.0
  %415 = vmatprep.subr.mxu0 0.0
  %416 = vmatpush1.msra.mxu0 0.0
  %417 = vmatprep.subr.mxu0 0.0
  %418 = vmatpush1.msra.mxu0 0.0
  %419 = vmatprep.mubr.f32.mxu0 0.0
  %420 = vmatmul.mubr.f32.gmra.mrb[0].mxu0 %v353
  %v421 = vpop.f32.mrb[0].mxu0
  %v422 = vadd.f32 0.0, %v421
  %v423 = vpop.f32.mrb[0].mxu0
  %424 = vdwg.mxu0
  %v425 = vadd.f32 %v348, %v422
  %v426 = vadd.f32 %v425, %v40
  %v427 = vxor.u32 %v426, 2147483648
  %v428 = vmul.f32 %v427, 1.442695
  %v429 = vpow.pop %v428
  %v430 = vadd.f32 %v429, 1.0
  %v431 = vrcp.pop %v430
  %v432 = vmul.f32 1.0, %v431
  %v433 = vmul.f32 %v432, 2.0
  %v434 = vsub.f32 %v433, 1.0
  %v435 = vmul.f32 %v432, %v239
  %437 = vrot.lane.b32.xlu0 %v434, 64
  %v438 = vpop.permute.xlu0 %437
  %v440 = vmul.f32 %v432, %v438
  %442 = vrot.lane.b32.xlu0 %v440, 32
  %v443 = vpop.permute.xlu0 %442
  %v445 = vadd.f32 %v435, %v443
  %v446 = vtanh.pop %v445
  %448 = vrot.lane.b32.xlu0 %v446, 64
  %v449 = vpop.permute.xlu0 %448
  %v451 = vmul.f32 %v432, %v449
  %s452 = scalar_lea.vmem %s0, 16
  %v453 = vld [vmem:[%s452] sm:$0xff]
  %v454 = vadd.f32 %v453, %v346
  %v455 = vxor.u32 %v454, 2147483648
  %v456 = vmul.f32 %v455, 1.442695
  %v457 = vpow.pop %v456
  %v458 = vadd.f32 %v457, 1.0
  %v459 = vrcp.pop %v458
  %v460 = vmul.f32 1.0, %v459
  %v461 = vmul.f32 %v460, 2.0
  %v462 = vsub.f32 %v461, 1.0
  %v463 = vmul.f32 %v460, %v267
  %465 = vrot.lane.b32.xlu0 %v462, 64
  %v466 = vpop.permute.xlu0 %465
  %v468 = vmul.f32 %v460, %v466
  %470 = vrot.lane.b32.xlu0 %v468, 32
  %v471 = vpop.permute.xlu0 %470
  %v473 = vadd.f32 %v463, %v471
  %v474 = vtanh.pop %v473
  %476 = vrot.lane.b32.xlu0 %v474, 64
  %v477 = vpop.permute.xlu0 %476
  %v479 = vmul.f32 %v460, %v477
  %481 = vrot.lane.b32.xlu0 %v479, 32
  %v482 = vpop.permute.xlu0 %481
  %v483 = vsel %vm72, %v482, 0
  %485 = vmatprep.subr.mxu0 %v24
  %486 = vmatpush1.msra.mxu0 %v23
  %487 = vmatprep.subr.mxu0 %v26
  %488 = vmatpush1.msra.mxu0 %v25
  %489 = vmatprep.subr.mxu0 %v28
  %490 = vmatpush1.msra.mxu0 %v27
  %491 = vmatprep.subr.mxu0 %v30
  %492 = vmatpush1.msra.mxu0 %v29
  %493 = vmatprep.subr.mxu0 0.0
  %494 = vmatpush1.msra.mxu0 0.0
  %495 = vmatprep.subr.mxu0 0.0
  %496 = vmatpush1.msra.mxu0 0.0
  %497 = vmatprep.subr.mxu0 0.0
  %498 = vmatpush1.msra.mxu0 0.0
  %499 = vmatprep.subr.mxu0 0.0
  %500 = vmatpush1.msra.mxu0 0.0
  %501 = vmatprep.subr.mxu0 0.0
  %502 = vmatpush1.msra.mxu0 0.0
  %503 = vmatprep.subr.mxu0 0.0
  %504 = vmatpush1.msra.mxu0 0.0
  %505 = vmatprep.subr.mxu0 0.0
  %506 = vmatpush1.msra.mxu0 0.0
  %507 = vmatprep.subr.mxu0 0.0
  %508 = vmatpush1.msra.mxu0 0.0
  %509 = vmatprep.subr.mxu0 0.0
  %510 = vmatpush1.msra.mxu0 0.0
  %511 = vmatprep.subr.mxu0 0.0
  %512 = vmatpush1.msra.mxu0 0.0
  %513 = vmatprep.subr.mxu0 0.0
  %514 = vmatpush1.msra.mxu0 0.0
  %515 = vmatprep.subr.mxu0 0.0
  %516 = vmatpush1.msra.mxu0 0.0
  %517 = vmatprep.subr.mxu0 0.0
  %518 = vmatpush1.msra.mxu0 0.0
  %519 = vmatprep.subr.mxu0 0.0
  %520 = vmatpush1.msra.mxu0 0.0
  %521 = vmatprep.subr.mxu0 0.0
  %522 = vmatpush1.msra.mxu0 0.0
  %523 = vmatprep.subr.mxu0 0.0
  %524 = vmatpush1.msra.mxu0 0.0
  %525 = vmatprep.subr.mxu0 0.0
  %526 = vmatpush1.msra.mxu0 0.0
  %527 = vmatprep.subr.mxu0 0.0
  %528 = vmatpush1.msra.mxu0 0.0
  %529 = vmatprep.subr.mxu0 0.0
  %530 = vmatpush1.msra.mxu0 0.0
  %531 = vmatprep.subr.mxu0 0.0
  %532 = vmatpush1.msra.mxu0 0.0
  %533 = vmatprep.subr.mxu0 0.0
  %534 = vmatpush1.msra.mxu0 0.0
  %535 = vmatprep.subr.mxu0 0.0
  %536 = vmatpush1.msra.mxu0 0.0
  %537 = vmatprep.subr.mxu0 0.0
  %538 = vmatpush1.msra.mxu0 0.0
  %539 = vmatprep.subr.mxu0 0.0
  %540 = vmatpush1.msra.mxu0 0.0
  %541 = vmatprep.subr.mxu0 0.0
  %542 = vmatpush1.msra.mxu0 0.0
  %543 = vmatprep.subr.mxu0 0.0
  %544 = vmatpush1.msra.mxu0 0.0
  %545 = vmatprep.subr.mxu0 0.0
  %546 = vmatpush1.msra.mxu0 0.0
  %547 = vmatprep.subr.mxu0 0.0
  %548 = vmatpush1.msra.mxu0 0.0
  %549 = vmatprep.mubr.f32.mxu0 0.0
  %550 = vmatmul.mubr.f32.gmra.mrb[0].mxu0 %v483
  %v551 = vpop.f32.mrb[0].mxu0
  %v552 = vadd.f32 0.0, %v551
  %v553 = vpop.f32.mrb[0].mxu0
  %v554 = vadd.f32 0.0, %v553
  %555 = vdwg.mxu0
  %557 = vrot.lane.b32.xlu0 %v451, 32
  %v558 = vpop.permute.xlu0 %557
  %v559 = vsel %vm72, %v558, 0
  %561 = vmatprep.subr.mxu0 0.0
  %562 = vmatpush1.msra.mxu0 %v31
  %563 = vmatprep.subr.mxu0 0.0
  %564 = vmatpush1.msra.mxu0 %v32
  %565 = vmatprep.subr.mxu0 0.0
  %566 = vmatpush1.msra.mxu0 %v33
  %567 = vmatprep.subr.mxu0 0.0
  %568 = vmatpush1.msra.mxu0 %v34
  %569 = vmatprep.subr.mxu0 0.0
  %570 = vmatpush1.msra.mxu0 0.0
  %571 = vmatprep.subr.mxu0 0.0
  %572 = vmatpush1.msra.mxu0 0.0
  %573 = vmatprep.subr.mxu0 0.0
  %574 = vmatpush1.msra.mxu0 0.0
  %575 = vmatprep.subr.mxu0 0.0
  %576 = vmatpush1.msra.mxu0 0.0
  %577 = vmatprep.subr.mxu0 0.0
  %578 = vmatpush1.msra.mxu0 0.0
  %579 = vmatprep.subr.mxu0 0.0
  %580 = vmatpush1.msra.mxu0 0.0
  %581 = vmatprep.subr.mxu0 0.0
  %582 = vmatpush1.msra.mxu0 0.0
  %583 = vmatprep.subr.mxu0 0.0
  %584 = vmatpush1.msra.mxu0 0.0
  %585 = vmatprep.subr.mxu0 0.0
  %586 = vmatpush1.msra.mxu0 0.0
  %587 = vmatprep.subr.mxu0 0.0
  %588 = vmatpush1.msra.mxu0 0.0
  %589 = vmatprep.subr.mxu0 0.0
  %590 = vmatpush1.msra.mxu0 0.0
  %591 = vmatprep.subr.mxu0 0.0
  %592 = vmatpush1.msra.mxu0 0.0
  %593 = vmatprep.subr.mxu0 0.0
  %594 = vmatpush1.msra.mxu0 0.0
  %595 = vmatprep.subr.mxu0 0.0
  %596 = vmatpush1.msra.mxu0 0.0
  %597 = vmatprep.subr.mxu0 0.0
  %598 = vmatpush1.msra.mxu0 0.0
  %599 = vmatprep.subr.mxu0 0.0
  %600 = vmatpush1.msra.mxu0 0.0
  %601 = vmatprep.subr.mxu0 0.0
  %602 = vmatpush1.msra.mxu0 0.0
  %603 = vmatprep.subr.mxu0 0.0
  %604 = vmatpush1.msra.mxu0 0.0
  %605 = vmatprep.subr.mxu0 0.0
  %606 = vmatpush1.msra.mxu0 0.0
  %607 = vmatprep.subr.mxu0 0.0
  %608 = vmatpush1.msra.mxu0 0.0
  %609 = vmatprep.subr.mxu0 0.0
  %610 = vmatpush1.msra.mxu0 0.0
  %611 = vmatprep.subr.mxu0 0.0
  %612 = vmatpush1.msra.mxu0 0.0
  %613 = vmatprep.subr.mxu0 0.0
  %614 = vmatpush1.msra.mxu0 0.0
  %615 = vmatprep.subr.mxu0 0.0
  %616 = vmatpush1.msra.mxu0 0.0
  %617 = vmatprep.subr.mxu0 0.0
  %618 = vmatpush1.msra.mxu0 0.0
  %619 = vmatprep.subr.mxu0 0.0
  %620 = vmatpush1.msra.mxu0 0.0
  %621 = vmatprep.subr.mxu0 0.0
  %622 = vmatpush1.msra.mxu0 0.0
  %623 = vmatprep.subr.mxu0 0.0
  %624 = vmatpush1.msra.mxu0 0.0
  %625 = vmatprep.mubr.f32.mxu0 0.0
  %626 = vmatmul.mubr.f32.gmra.mrb[0].mxu0 %v559
  %v627 = vpop.f32.mrb[0].mxu0
  %v628 = vadd.f32 0.0, %v627
  %v629 = vpop.f32.mrb[0].mxu0
  %630 = vdwg.mxu0
  %v631 = vadd.f32 %v554, %v628
  %v632 = vadd.f32 %v631, %v40
  %v633 = vxor.u32 %v632, 2147483648
  %v634 = vmul.f32 %v633, 1.442695
  %v635 = vpow.pop %v634
  %v636 = vadd.f32 %v635, 1.0
  %v637 = vrcp.pop %v636
  %v638 = vmul.f32 1.0, %v637
  %v639 = vmul.f32 %v638, 2.0
  %v640 = vsub.f32 %v639, 1.0
  %v641 = vmul.f32 %v638, %v445
  %643 = vrot.lane.b32.xlu0 %v640, 64
  %v644 = vpop.permute.xlu0 %643
  %v646 = vmul.f32 %v638, %v644
  %648 = vrot.lane.b32.xlu0 %v646, 32
  %v649 = vpop.permute.xlu0 %648
  %v651 = vadd.f32 %v641, %v649
  %v652 = vtanh.pop %v651
  %654 = vrot.lane.b32.xlu0 %v652, 64
  %v655 = vpop.permute.xlu0 %654
  %v657 = vmul.f32 %v638, %v655
  %s658 = scalar_lea.vmem %s0, 24
  %v659 = vld [vmem:[%s658] sm:$0xff]
  %v660 = vadd.f32 %v659, %v552
  %v661 = vxor.u32 %v660, 2147483648
  %v662 = vmul.f32 %v661, 1.442695
  %v663 = vpow.pop %v662
  %v664 = vadd.f32 %v663, 1.0
  %v665 = vrcp.pop %v664
  %v666 = vmul.f32 1.0, %v665
  %v667 = vmul.f32 %v666, 2.0
  %v668 = vsub.f32 %v667, 1.0
  %v669 = vmul.f32 %v666, %v473
  %671 = vrot.lane.b32.xlu0 %v668, 64
  %v672 = vpop.permute.xlu0 %671
  %v674 = vmul.f32 %v666, %v672
  %676 = vrot.lane.b32.xlu0 %v674, 32
  %v677 = vpop.permute.xlu0 %676
  %v679 = vadd.f32 %v669, %v677
  %v680 = vtanh.pop %v679
  %682 = vrot.lane.b32.xlu0 %v680, 64
  %v683 = vpop.permute.xlu0 %682
  %v685 = vmul.f32 %v666, %v683
  %687 = vrot.lane.b32.xlu0 %v685, 32
  %v688 = vpop.permute.xlu0 %687
  %v689 = vsel %vm72, %v688, 0
  %691 = vmatprep.subr.mxu0 %v24
  %692 = vmatpush1.msra.mxu0 %v23
  %693 = vmatprep.subr.mxu0 %v26
  %694 = vmatpush1.msra.mxu0 %v25
  %695 = vmatprep.subr.mxu0 %v28
  %696 = vmatpush1.msra.mxu0 %v27
  %697 = vmatprep.subr.mxu0 %v30
  %698 = vmatpush1.msra.mxu0 %v29
  %699 = vmatprep.subr.mxu0 0.0
  %700 = vmatpush1.msra.mxu0 0.0
  %701 = vmatprep.subr.mxu0 0.0
  %702 = vmatpush1.msra.mxu0 0.0
  %703 = vmatprep.subr.mxu0 0.0
  %704 = vmatpush1.msra.mxu0 0.0
  %705 = vmatprep.subr.mxu0 0.0
  %706 = vmatpush1.msra.mxu0 0.0
  %707 = vmatprep.subr.mxu0 0.0
  %708 = vmatpush1.msra.mxu0 0.0
  %709 = vmatprep.subr.mxu0 0.0
  %710 = vmatpush1.msra.mxu0 0.0
  %711 = vmatprep.subr.mxu0 0.0
  %712 = vmatpush1.msra.mxu0 0.0
  %713 = vmatprep.subr.mxu0 0.0
  %714 = vmatpush1.msra.mxu0 0.0
  %715 = vmatprep.subr.mxu0 0.0
  %716 = vmatpush1.msra.mxu0 0.0
  %717 = vmatprep.subr.mxu0 0.0
  %718 = vmatpush1.msra.mxu0 0.0
  %719 = vmatprep.subr.mxu0 0.0
  %720 = vmatpush1.msra.mxu0 0.0
  %721 = vmatprep.subr.mxu0 0.0
  %722 = vmatpush1.msra.mxu0 0.0
  %723 = vmatprep.subr.mxu0 0.0
  %724 = vmatpush1.msra.mxu0 0.0
  %725 = vmatprep.subr.mxu0 0.0
  %726 = vmatpush1.msra.mxu0 0.0
  %727 = vmatprep.subr.mxu0 0.0
  %728 = vmatpush1.msra.mxu0 0.0
  %729 = vmatprep.subr.mxu0 0.0
  %730 = vmatpush1.msra.mxu0 0.0
  %731 = vmatprep.subr.mxu0 0.0
  %732 = vmatpush1.msra.mxu0 0.0
  %733 = vmatprep.subr.mxu0 0.0
  %734 = vmatpush1.msra.mxu0 0.0
  %735 = vmatprep.subr.mxu0 0.0
  %736 = vmatpush1.msra.mxu0 0.0
  %737 = vmatprep.subr.mxu0 0.0
  %738 = vmatpush1.msra.mxu0 0.0
  %739 = vmatprep.subr.mxu0 0.0
  %740 = vmatpush1.msra.mxu0 0.0
  %741 = vmatprep.subr.mxu0 0.0
  %742 = vmatpush1.msra.mxu0 0.0
  %743 = vmatprep.subr.mxu0 0.0
  %744 = vmatpush1.msra.mxu0 0.0
  %745 = vmatprep.subr.mxu0 0.0
  %746 = vmatpush1.msra.mxu0 0.0
  %747 = vmatprep.subr.mxu0 0.0
  %748 = vmatpush1.msra.mxu0 0.0
  %749 = vmatprep.subr.mxu0 0.0
  %750 = vmatpush1.msra.mxu0 0.0
  %751 = vmatprep.subr.mxu0 0.0
  %752 = vmatpush1.msra.mxu0 0.0
  %753 = vmatprep.subr.mxu0 0.0
  %754 = vmatpush1.msra.mxu0 0.0
  %755 = vmatprep.mubr.f32.mxu0 0.0
  %756 = vmatmul.mubr.f32.gmra.mrb[0].mxu0 %v689
  %v757 = vpop.f32.mrb[0].mxu0
  %v758 = vadd.f32 0.0, %v757
  %v759 = vpop.f32.mrb[0].mxu0
  %v760 = vadd.f32 0.0, %v759
  %761 = vdwg.mxu0
  %763 = vrot.lane.b32.xlu0 %v657, 32
  %v764 = vpop.permute.xlu0 %763
  %v765 = vsel %vm72, %v764, 0
  %767 = vmatprep.subr.mxu0 0.0
  %768 = vmatpush1.msra.mxu0 %v31
  %769 = vmatprep.subr.mxu0 0.0
  %770 = vmatpush1.msra.mxu0 %v32
  %771 = vmatprep.subr.mxu0 0.0
  %772 = vmatpush1.msra.mxu0 %v33
  %773 = vmatprep.subr.mxu0 0.0
  %774 = vmatpush1.msra.mxu0 %v34
  %775 = vmatprep.subr.mxu0 0.0
  %776 = vmatpush1.msra.mxu0 0.0
  %777 = vmatprep.subr.mxu0 0.0
  %778 = vmatpush1.msra.mxu0 0.0
  %779 = vmatprep.subr.mxu0 0.0
  %780 = vmatpush1.msra.mxu0 0.0
  %781 = vmatprep.subr.mxu0 0.0
  %782 = vmatpush1.msra.mxu0 0.0
  %783 = vmatprep.subr.mxu0 0.0
  %784 = vmatpush1.msra.mxu0 0.0
  %785 = vmatprep.subr.mxu0 0.0
  %786 = vmatpush1.msra.mxu0 0.0
  %787 = vmatprep.subr.mxu0 0.0
  %788 = vmatpush1.msra.mxu0 0.0
  %789 = vmatprep.subr.mxu0 0.0
  %790 = vmatpush1.msra.mxu0 0.0
  %791 = vmatprep.subr.mxu0 0.0
  %792 = vmatpush1.msra.mxu0 0.0
  %793 = vmatprep.subr.mxu0 0.0
  %794 = vmatpush1.msra.mxu0 0.0
  %795 = vmatprep.subr.mxu0 0.0
  %796 = vmatpush1.msra.mxu0 0.0
  %797 = vmatprep.subr.mxu0 0.0
  %798 = vmatpush1.msra.mxu0 0.0
  %799 = vmatprep.subr.mxu0 0.0
  %800 = vmatpush1.msra.mxu0 0.0
  %801 = vmatprep.subr.mxu0 0.0
  %802 = vmatpush1.msra.mxu0 0.0
  %803 = vmatprep.subr.mxu0 0.0
  %804 = vmatpush1.msra.mxu0 0.0
  %805 = vmatprep.subr.mxu0 0.0
  %806 = vmatpush1.msra.mxu0 0.0
  %807 = vmatprep.subr.mxu0 0.0
  %808 = vmatpush1.msra.mxu0 0.0
  %809 = vmatprep.subr.mxu0 0.0
  %810 = vmatpush1.msra.mxu0 0.0
  %811 = vmatprep.subr.mxu0 0.0
  %812 = vmatpush1.msra.mxu0 0.0
  %813 = vmatprep.subr.mxu0 0.0
  %814 = vmatpush1.msra.mxu0 0.0
  %815 = vmatprep.subr.mxu0 0.0
  %816 = vmatpush1.msra.mxu0 0.0
  %817 = vmatprep.subr.mxu0 0.0
  %818 = vmatpush1.msra.mxu0 0.0
  %819 = vmatprep.subr.mxu0 0.0
  %820 = vmatpush1.msra.mxu0 0.0
  %821 = vmatprep.subr.mxu0 0.0
  %822 = vmatpush1.msra.mxu0 0.0
  %823 = vmatprep.subr.mxu0 0.0
  %824 = vmatpush1.msra.mxu0 0.0
  %825 = vmatprep.subr.mxu0 0.0
  %826 = vmatpush1.msra.mxu0 0.0
  %827 = vmatprep.subr.mxu0 0.0
  %828 = vmatpush1.msra.mxu0 0.0
  %829 = vmatprep.subr.mxu0 0.0
  %830 = vmatpush1.msra.mxu0 0.0
  %831 = vmatprep.mubr.f32.mxu0 0.0
  %832 = vmatmul.mubr.f32.gmra.mrb[0].mxu0 %v765
  %v833 = vpop.f32.mrb[0].mxu0
  %v834 = vadd.f32 0.0, %v833
  %v835 = vpop.f32.mrb[0].mxu0
  %836 = vdwg.mxu0
  %v837 = vadd.f32 %v760, %v834
  %v838 = vadd.f32 %v837, %v40
  %v839 = vxor.u32 %v838, 2147483648
  %v840 = vmul.f32 %v839, 1.442695
  %v841 = vpow.pop %v840
  %v842 = vadd.f32 %v841, 1.0
  %v843 = vrcp.pop %v842
  %v844 = vmul.f32 1.0, %v843
  %v845 = vmul.f32 %v844, 2.0
  %v846 = vsub.f32 %v845, 1.0
  %v847 = vmul.f32 %v844, %v651
  %849 = vrot.lane.b32.xlu0 %v846, 64
  %v850 = vpop.permute.xlu0 %849
  %v852 = vmul.f32 %v844, %v850
  %854 = vrot.lane.b32.xlu0 %v852, 32
  %v855 = vpop.permute.xlu0 %854
  %v857 = vadd.f32 %v847, %v855
  %v858 = vtanh.pop %v857
  %860 = vrot.lane.b32.xlu0 %v858, 64
  %v861 = vpop.permute.xlu0 %860
  %v863 = vmul.f32 %v844, %v861
  %s864 = scalar_lea.vmem %s0, 32
  %v865 = vld [vmem:[%s864] sm:$0xff]
  %v866 = vadd.f32 %v865, %v758
  %v867 = vxor.u32 %v866, 2147483648
  %v868 = vmul.f32 %v867, 1.442695
  %v869 = vpow.pop %v868
  %v870 = vadd.f32 %v869, 1.0
  %v871 = vrcp.pop %v870
  %v872 = vmul.f32 1.0, %v871
  %v873 = vmul.f32 %v872, 2.0
  %v874 = vsub.f32 %v873, 1.0
  %v875 = vmul.f32 %v872, %v679
  %877 = vrot.lane.b32.xlu0 %v874, 64
  %v878 = vpop.permute.xlu0 %877
  %v880 = vmul.f32 %v872, %v878
  %882 = vrot.lane.b32.xlu0 %v880, 32
  %v883 = vpop.permute.xlu0 %882
  %v885 = vadd.f32 %v875, %v883
  %v886 = vtanh.pop %v885
  %888 = vrot.lane.b32.xlu0 %v886, 64
  %v889 = vpop.permute.xlu0 %888
  %v891 = vmul.f32 %v872, %v889
  %893 = vrot.lane.b32.xlu0 %v891, 32
  %v894 = vpop.permute.xlu0 %893
  %v895 = vsel %vm72, %v894, 0
  %897 = vmatprep.subr.mxu0 %v24
  %898 = vmatpush1.msra.mxu0 %v23
  %899 = vmatprep.subr.mxu0 %v26
  %900 = vmatpush1.msra.mxu0 %v25
  %901 = vmatprep.subr.mxu0 %v28
  %902 = vmatpush1.msra.mxu0 %v27
  %903 = vmatprep.subr.mxu0 %v30
  %904 = vmatpush1.msra.mxu0 %v29
  %905 = vmatprep.subr.mxu0 0.0
  %906 = vmatpush1.msra.mxu0 0.0
  %907 = vmatprep.subr.mxu0 0.0
  %908 = vmatpush1.msra.mxu0 0.0
  %909 = vmatprep.subr.mxu0 0.0
  %910 = vmatpush1.msra.mxu0 0.0
  %911 = vmatprep.subr.mxu0 0.0
  %912 = vmatpush1.msra.mxu0 0.0
  %913 = vmatprep.subr.mxu0 0.0
  %914 = vmatpush1.msra.mxu0 0.0
  %915 = vmatprep.subr.mxu0 0.0
  %916 = vmatpush1.msra.mxu0 0.0
  %917 = vmatprep.subr.mxu0 0.0
  %918 = vmatpush1.msra.mxu0 0.0
  %919 = vmatprep.subr.mxu0 0.0
  %920 = vmatpush1.msra.mxu0 0.0
  %921 = vmatprep.subr.mxu0 0.0
  %922 = vmatpush1.msra.mxu0 0.0
  %923 = vmatprep.subr.mxu0 0.0
  %924 = vmatpush1.msra.mxu0 0.0
  %925 = vmatprep.subr.mxu0 0.0
  %926 = vmatpush1.msra.mxu0 0.0
  %927 = vmatprep.subr.mxu0 0.0
  %928 = vmatpush1.msra.mxu0 0.0
  %929 = vmatprep.subr.mxu0 0.0
  %930 = vmatpush1.msra.mxu0 0.0
  %931 = vmatprep.subr.mxu0 0.0
  %932 = vmatpush1.msra.mxu0 0.0
  %933 = vmatprep.subr.mxu0 0.0
  %934 = vmatpush1.msra.mxu0 0.0
  %935 = vmatprep.subr.mxu0 0.0
  %936 = vmatpush1.msra.mxu0 0.0
  %937 = vmatprep.subr.mxu0 0.0
  %938 = vmatpush1.msra.mxu0 0.0
  %939 = vmatprep.subr.mxu0 0.0
  %940 = vmatpush1.msra.mxu0 0.0
  %941 = vmatprep.subr.mxu0 0.0
  %942 = vmatpush1.msra.mxu0 0.0
  %943 = vmatprep.subr.mxu0 0.0
  %944 = vmatpush1.msra.mxu0 0.0
  %945 = vmatprep.subr.mxu0 0.0
  %946 = vmatpush1.msra.mxu0 0.0
  %947 = vmatprep.subr.mxu0 0.0
  %948 = vmatpush1.msra.mxu0 0.0
  %949 = vmatprep.subr.mxu0 0.0
  %950 = vmatpush1.msra.mxu0 0.0
  %951 = vmatprep.subr.mxu0 0.0
  %952 = vmatpush1.msra.mxu0 0.0
  %953 = vmatprep.subr.mxu0 0.0
  %954 = vmatpush1.msra.mxu0 0.0
  %955 = vmatprep.subr.mxu0 0.0
  %956 = vmatpush1.msra.mxu0 0.0
  %957 = vmatprep.subr.mxu0 0.0
  %958 = vmatpush1.msra.mxu0 0.0
  %959 = vmatprep.subr.mxu0 0.0
  %960 = vmatpush1.msra.mxu0 0.0
  %961 = vmatprep.mubr.f32.mxu0 0.0
  %962 = vmatmul.mubr.f32.gmra.mrb[0].mxu0 %v895
  %v963 = vpop.f32.mrb[0].mxu0
  %v964 = vadd.f32 0.0, %v963
  %v965 = vpop.f32.mrb[0].mxu0
  %v966 = vadd.f32 0.0, %v965
  %967 = vdwg.mxu0
  %969 = vrot.lane.b32.xlu0 %v863, 32
  %v970 = vpop.permute.xlu0 %969
  %v971 = vsel %vm72, %v970, 0
  %973 = vmatprep.subr.mxu0 0.0
  %974 = vmatpush1.msra.mxu0 %v31
  %975 = vmatprep.subr.mxu0 0.0
  %976 = vmatpush1.msra.mxu0 %v32
  %977 = vmatprep.subr.mxu0 0.0
  %978 = vmatpush1.msra.mxu0 %v33
  %979 = vmatprep.subr.mxu0 0.0
  %980 = vmatpush1.msra.mxu0 %v34
  %981 = vmatprep.subr.mxu0 0.0
  %982 = vmatpush1.msra.mxu0 0.0
  %983 = vmatprep.subr.mxu0 0.0
  %984 = vmatpush1.msra.mxu0 0.0
  %985 = vmatprep.subr.mxu0 0.0
  %986 = vmatpush1.msra.mxu0 0.0
  %987 = vmatprep.subr.mxu0 0.0
  %988 = vmatpush1.msra.mxu0 0.0
  %989 = vmatprep.subr.mxu0 0.0
  %990 = vmatpush1.msra.mxu0 0.0
  %991 = vmatprep.subr.mxu0 0.0
  %992 = vmatpush1.msra.mxu0 0.0
  %993 = vmatprep.subr.mxu0 0.0
  %994 = vmatpush1.msra.mxu0 0.0
  %995 = vmatprep.subr.mxu0 0.0
  %996 = vmatpush1.msra.mxu0 0.0
  %997 = vmatprep.subr.mxu0 0.0
  %998 = vmatpush1.msra.mxu0 0.0
  %999 = vmatprep.subr.mxu0 0.0
  %1000 = vmatpush1.msra.mxu0 0.0
  %1001 = vmatprep.subr.mxu0 0.0
  %1002 = vmatpush1.msra.mxu0 0.0
  %1003 = vmatprep.subr.mxu0 0.0
  %1004 = vmatpush1.msra.mxu0 0.0
  %1005 = vmatprep.subr.mxu0 0.0
  %1006 = vmatpush1.msra.mxu0 0.0
  %1007 = vmatprep.subr.mxu0 0.0
  %1008 = vmatpush1.msra.mxu0 0.0
  %1009 = vmatprep.subr.mxu0 0.0
  %1010 = vmatpush1.msra.mxu0 0.0
  %1011 = vmatprep.subr.mxu0 0.0
  %1012 = vmatpush1.msra.mxu0 0.0
  %1013 = vmatprep.subr.mxu0 0.0
  %1014 = vmatpush1.msra.mxu0 0.0
  %1015 = vmatprep.subr.mxu0 0.0
  %1016 = vmatpush1.msra.mxu0 0.0
  %1017 = vmatprep.subr.mxu0 0.0
  %1018 = vmatpush1.msra.mxu0 0.0
  %1019 = vmatprep.subr.mxu0 0.0
  %1020 = vmatpush1.msra.mxu0 0.0
  %1021 = vmatprep.subr.mxu0 0.0
  %1022 = vmatpush1.msra.mxu0 0.0
  %1023 = vmatprep.subr.mxu0 0.0
  %1024 = vmatpush1.msra.mxu0 0.0
  %1025 = vmatprep.subr.mxu0 0.0
  %1026 = vmatpush1.msra.mxu0 0.0
  %1027 = vmatprep.subr.mxu0 0.0
  %1028 = vmatpush1.msra.mxu0 0.0
  %1029 = vmatprep.subr.mxu0 0.0
  %1030 = vmatpush1.msra.mxu0 0.0
  %1031 = vmatprep.subr.mxu0 0.0
  %1032 = vmatpush1.msra.mxu0 0.0
  %1033 = vmatprep.subr.mxu0 0.0
  %1034 = vmatpush1.msra.mxu0 0.0
  %1035 = vmatprep.subr.mxu0 0.0
  %1036 = vmatpush1.msra.mxu0 0.0
  %1037 = vmatprep.mubr.f32.mxu0 0.0
  %1038 = vmatmul.mubr.f32.gmra.mrb[0].mxu0 %v971
  %v1039 = vpop.f32.mrb[0].mxu0
  %v1040 = vadd.f32 0.0, %v1039
  %v1041 = vpop.f32.mrb[0].mxu0
  %1042 = vdwg.mxu0
  %v1043 = vadd.f32 %v966, %v1040
  %v1044 = vadd.f32 %v1043, %v40
  %v1045 = vxor.u32 %v1044, 2147483648
  %v1046 = vmul.f32 %v1045, 1.442695
  %v1047 = vpow.pop %v1046
  %v1048 = vadd.f32 %v1047, 1.0
  %v1049 = vrcp.pop %v1048
  %v1050 = vmul.f32 1.0, %v1049
  %v1051 = vmul.f32 %v1050, 2.0
  %v1052 = vsub.f32 %v1051, 1.0
  %v1053 = vmul.f32 %v1050, %v857
  %1055 = vrot.lane.b32.xlu0 %v1052, 64
  %v1056 = vpop.permute.xlu0 %1055
  %v1058 = vmul.f32 %v1050, %v1056
  %1060 = vrot.lane.b32.xlu0 %v1058, 32
  %v1061 = vpop.permute.xlu0 %1060
  %v1063 = vadd.f32 %v1053, %v1061
  %v1064 = vtanh.pop %v1063
  %1066 = vrot.lane.b32.xlu0 %v1064, 64
  %v1067 = vpop.permute.xlu0 %1066
  %v1069 = vmul.f32 %v1050, %v1067
  %s1070 = scalar_lea.vmem %s0, 40
  %v1071 = vld [vmem:[%s1070] sm:$0xff]
  %v1072 = vadd.f32 %v1071, %v964
  %v1073 = vxor.u32 %v1072, 2147483648
  %v1074 = vmul.f32 %v1073, 1.442695
  %v1075 = vpow.pop %v1074
  %v1076 = vadd.f32 %v1075, 1.0
  %v1077 = vrcp.pop %v1076
  %v1078 = vmul.f32 1.0, %v1077
  %v1079 = vmul.f32 %v1078, 2.0
  %v1080 = vsub.f32 %v1079, 1.0
  %v1081 = vmul.f32 %v1078, %v885
  %1083 = vrot.lane.b32.xlu0 %v1080, 64
  %v1084 = vpop.permute.xlu0 %1083
  %v1086 = vmul.f32 %v1078, %v1084
  %1088 = vrot.lane.b32.xlu0 %v1086, 32
  %v1089 = vpop.permute.xlu0 %1088
  %v1091 = vadd.f32 %v1081, %v1089
  %v1092 = vtanh.pop %v1091
  %1094 = vrot.lane.b32.xlu0 %v1092, 64
  %v1095 = vpop.permute.xlu0 %1094
  %v1097 = vmul.f32 %v1078, %v1095
  %1099 = vrot.lane.b32.xlu0 %v1097, 32
  %v1100 = vpop.permute.xlu0 %1099
  %v1101 = vsel %vm72, %v1100, 0
  %1103 = vmatprep.subr.mxu0 %v24
  %1104 = vmatpush1.msra.mxu0 %v23
  %1105 = vmatprep.subr.mxu0 %v26
  %1106 = vmatpush1.msra.mxu0 %v25
  %1107 = vmatprep.subr.mxu0 %v28
  %1108 = vmatpush1.msra.mxu0 %v27
  %1109 = vmatprep.subr.mxu0 %v30
  %1110 = vmatpush1.msra.mxu0 %v29
  %1111 = vmatprep.subr.mxu0 0.0
  %1112 = vmatpush1.msra.mxu0 0.0
  %1113 = vmatprep.subr.mxu0 0.0
  %1114 = vmatpush1.msra.mxu0 0.0
  %1115 = vmatprep.subr.mxu0 0.0
  %1116 = vmatpush1.msra.mxu0 0.0
  %1117 = vmatprep.subr.mxu0 0.0
  %1118 = vmatpush1.msra.mxu0 0.0
  %1119 = vmatprep.subr.mxu0 0.0
  %1120 = vmatpush1.msra.mxu0 0.0
  %1121 = vmatprep.subr.mxu0 0.0
  %1122 = vmatpush1.msra.mxu0 0.0
  %1123 = vmatprep.subr.mxu0 0.0
  %1124 = vmatpush1.msra.mxu0 0.0
  %1125 = vmatprep.subr.mxu0 0.0
  %1126 = vmatpush1.msra.mxu0 0.0
  %1127 = vmatprep.subr.mxu0 0.0
  %1128 = vmatpush1.msra.mxu0 0.0
  %1129 = vmatprep.subr.mxu0 0.0
  %1130 = vmatpush1.msra.mxu0 0.0
  %1131 = vmatprep.subr.mxu0 0.0
  %1132 = vmatpush1.msra.mxu0 0.0
  %1133 = vmatprep.subr.mxu0 0.0
  %1134 = vmatpush1.msra.mxu0 0.0
  %1135 = vmatprep.subr.mxu0 0.0
  %1136 = vmatpush1.msra.mxu0 0.0
  %1137 = vmatprep.subr.mxu0 0.0
  %1138 = vmatpush1.msra.mxu0 0.0
  %1139 = vmatprep.subr.mxu0 0.0
  %1140 = vmatpush1.msra.mxu0 0.0
  %1141 = vmatprep.subr.mxu0 0.0
  %1142 = vmatpush1.msra.mxu0 0.0
  %1143 = vmatprep.subr.mxu0 0.0
  %1144 = vmatpush1.msra.mxu0 0.0
  %1145 = vmatprep.subr.mxu0 0.0
  %1146 = vmatpush1.msra.mxu0 0.0
  %1147 = vmatprep.subr.mxu0 0.0
  %1148 = vmatpush1.msra.mxu0 0.0
  %1149 = vmatprep.subr.mxu0 0.0
  %1150 = vmatpush1.msra.mxu0 0.0
  %1151 = vmatprep.subr.mxu0 0.0
  %1152 = vmatpush1.msra.mxu0 0.0
  %1153 = vmatprep.subr.mxu0 0.0
  %1154 = vmatpush1.msra.mxu0 0.0
  %1155 = vmatprep.subr.mxu0 0.0
  %1156 = vmatpush1.msra.mxu0 0.0
  %1157 = vmatprep.subr.mxu0 0.0
  %1158 = vmatpush1.msra.mxu0 0.0
  %1159 = vmatprep.subr.mxu0 0.0
  %1160 = vmatpush1.msra.mxu0 0.0
  %1161 = vmatprep.subr.mxu0 0.0
  %1162 = vmatpush1.msra.mxu0 0.0
  %1163 = vmatprep.subr.mxu0 0.0
  %1164 = vmatpush1.msra.mxu0 0.0
  %1165 = vmatprep.subr.mxu0 0.0
  %1166 = vmatpush1.msra.mxu0 0.0
  %1167 = vmatprep.mubr.f32.mxu0 0.0
  %1168 = vmatmul.mubr.f32.gmra.mrb[0].mxu0 %v1101
  %v1169 = vpop.f32.mrb[0].mxu0
  %v1170 = vadd.f32 0.0, %v1169
  %v1171 = vpop.f32.mrb[0].mxu0
  %v1172 = vadd.f32 0.0, %v1171
  %1173 = vdwg.mxu0
  %1175 = vrot.lane.b32.xlu0 %v1069, 32
  %v1176 = vpop.permute.xlu0 %1175
  %v1177 = vsel %vm72, %v1176, 0
  %1179 = vmatprep.subr.mxu0 0.0
  %1180 = vmatpush1.msra.mxu0 %v31
  %1181 = vmatprep.subr.mxu0 0.0
  %1182 = vmatpush1.msra.mxu0 %v32
  %1183 = vmatprep.subr.mxu0 0.0
  %1184 = vmatpush1.msra.mxu0 %v33
  %1185 = vmatprep.subr.mxu0 0.0
  %1186 = vmatpush1.msra.mxu0 %v34
  %1187 = vmatprep.subr.mxu0 0.0
  %1188 = vmatpush1.msra.mxu0 0.0
  %1189 = vmatprep.subr.mxu0 0.0
  %1190 = vmatpush1.msra.mxu0 0.0
  %1191 = vmatprep.subr.mxu0 0.0
  %1192 = vmatpush1.msra.mxu0 0.0
  %1193 = vmatprep.subr.mxu0 0.0
  %1194 = vmatpush1.msra.mxu0 0.0
  %1195 = vmatprep.subr.mxu0 0.0
  %1196 = vmatpush1.msra.mxu0 0.0
  %1197 = vmatprep.subr.mxu0 0.0
  %1198 = vmatpush1.msra.mxu0 0.0
  %1199 = vmatprep.subr.mxu0 0.0
  %1200 = vmatpush1.msra.mxu0 0.0
  %1201 = vmatprep.subr.mxu0 0.0
  %1202 = vmatpush1.msra.mxu0 0.0
  %1203 = vmatprep.subr.mxu0 0.0
  %1204 = vmatpush1.msra.mxu0 0.0
  %1205 = vmatprep.subr.mxu0 0.0
  %1206 = vmatpush1.msra.mxu0 0.0
  %1207 = vmatprep.subr.mxu0 0.0
  %1208 = vmatpush1.msra.mxu0 0.0
  %1209 = vmatprep.subr.mxu0 0.0
  %1210 = vmatpush1.msra.mxu0 0.0
  %1211 = vmatprep.subr.mxu0 0.0
  %1212 = vmatpush1.msra.mxu0 0.0
  %1213 = vmatprep.subr.mxu0 0.0
  %1214 = vmatpush1.msra.mxu0 0.0
  %1215 = vmatprep.subr.mxu0 0.0
  %1216 = vmatpush1.msra.mxu0 0.0
  %1217 = vmatprep.subr.mxu0 0.0
  %1218 = vmatpush1.msra.mxu0 0.0
  %1219 = vmatprep.subr.mxu0 0.0
  %1220 = vmatpush1.msra.mxu0 0.0
  %1221 = vmatprep.subr.mxu0 0.0
  %1222 = vmatpush1.msra.mxu0 0.0
  %1223 = vmatprep.subr.mxu0 0.0
  %1224 = vmatpush1.msra.mxu0 0.0
  %1225 = vmatprep.subr.mxu0 0.0
  %1226 = vmatpush1.msra.mxu0 0.0
  %1227 = vmatprep.subr.mxu0 0.0
  %1228 = vmatpush1.msra.mxu0 0.0
  %1229 = vmatprep.subr.mxu0 0.0
  %1230 = vmatpush1.msra.mxu0 0.0
  %1231 = vmatprep.subr.mxu0 0.0
  %1232 = vmatpush1.msra.mxu0 0.0
  %1233 = vmatprep.subr.mxu0 0.0
  %1234 = vmatpush1.msra.mxu0 0.0
  %1235 = vmatprep.subr.mxu0 0.0
  %1236 = vmatpush1.msra.mxu0 0.0
  %1237 = vmatprep.subr.mxu0 0.0
  %1238 = vmatpush1.msra.mxu0 0.0
  %1239 = vmatprep.subr.mxu0 0.0
  %1240 = vmatpush1.msra.mxu0 0.0
  %1241 = vmatprep.subr.mxu0 0.0
  %1242 = vmatpush1.msra.mxu0 0.0
  %1243 = vmatprep.mubr.f32.mxu0 0.0
  %1244 = vmatmul.mubr.f32.gmra.mrb[0].mxu0 %v1177
  %v1245 = vpop.f32.mrb[0].mxu0
  %v1246 = vadd.f32 0.0, %v1245
  %v1247 = vpop.f32.mrb[0].mxu0
  %1248 = vdwg.mxu0
  %v1249 = vadd.f32 %v1172, %v1246
  %v1250 = vadd.f32 %v1249, %v40
  %v1251 = vxor.u32 %v1250, 2147483648
  %v1252 = vmul.f32 %v1251, 1.442695
  %v1253 = vpow.pop %v1252
  %v1254 = vadd.f32 %v1253, 1.0
  %v1255 = vrcp.pop %v1254
  %v1256 = vmul.f32 1.0, %v1255
  %v1257 = vmul.f32 %v1256, 2.0
  %v1258 = vsub.f32 %v1257, 1.0
  %v1259 = vmul.f32 %v1256, %v1063
  %1261 = vrot.lane.b32.xlu0 %v1258, 64
  %v1262 = vpop.permute.xlu0 %1261
  %v1264 = vmul.f32 %v1256, %v1262
  %1266 = vrot.lane.b32.xlu0 %v1264, 32
  %v1267 = vpop.permute.xlu0 %1266
  %v1269 = vadd.f32 %v1259, %v1267
  %v1270 = vtanh.pop %v1269
  %1272 = vrot.lane.b32.xlu0 %v1270, 64
  %v1273 = vpop.permute.xlu0 %1272
  %v1275 = vmul.f32 %v1256, %v1273
  %s1276 = scalar_lea.vmem %s0, 48
  %v1277 = vld [vmem:[%s1276] sm:$0xff]
  %v1278 = vadd.f32 %v1277, %v1170
  %v1279 = vxor.u32 %v1278, 2147483648
  %v1280 = vmul.f32 %v1279, 1.442695
  %v1281 = vpow.pop %v1280
  %v1282 = vadd.f32 %v1281, 1.0
  %v1283 = vrcp.pop %v1282
  %v1284 = vmul.f32 1.0, %v1283
  %v1285 = vmul.f32 %v1284, 2.0
  %v1286 = vsub.f32 %v1285, 1.0
  %v1287 = vmul.f32 %v1284, %v1091
  %1289 = vrot.lane.b32.xlu0 %v1286, 64
  %v1290 = vpop.permute.xlu0 %1289
  %v1292 = vmul.f32 %v1284, %v1290
  %1294 = vrot.lane.b32.xlu0 %v1292, 32
  %v1295 = vpop.permute.xlu0 %1294
  %v1297 = vadd.f32 %v1287, %v1295
  %v1298 = vtanh.pop %v1297
  %1300 = vrot.lane.b32.xlu0 %v1298, 64
  %v1301 = vpop.permute.xlu0 %1300
  %v1303 = vmul.f32 %v1284, %v1301
  %1305 = vrot.lane.b32.xlu0 %v1303, 32
  %v1306 = vpop.permute.xlu0 %1305
  %v1307 = vsel %vm72, %v1306, 0
  %1309 = vmatprep.subr.mxu0 %v24
  %1310 = vmatpush1.msra.mxu0 %v23
  %1311 = vmatprep.subr.mxu0 %v26
  %1312 = vmatpush1.msra.mxu0 %v25
  %1313 = vmatprep.subr.mxu0 %v28
  %1314 = vmatpush1.msra.mxu0 %v27
  %1315 = vmatprep.subr.mxu0 %v30
  %1316 = vmatpush1.msra.mxu0 %v29
  %1317 = vmatprep.subr.mxu0 0.0
  %1318 = vmatpush1.msra.mxu0 0.0
  %1319 = vmatprep.subr.mxu0 0.0
  %1320 = vmatpush1.msra.mxu0 0.0
  %1321 = vmatprep.subr.mxu0 0.0
  %1322 = vmatpush1.msra.mxu0 0.0
  %1323 = vmatprep.subr.mxu0 0.0
  %1324 = vmatpush1.msra.mxu0 0.0
  %1325 = vmatprep.subr.mxu0 0.0
  %1326 = vmatpush1.msra.mxu0 0.0
  %1327 = vmatprep.subr.mxu0 0.0
  %1328 = vmatpush1.msra.mxu0 0.0
  %1329 = vmatprep.subr.mxu0 0.0
  %1330 = vmatpush1.msra.mxu0 0.0
  %1331 = vmatprep.subr.mxu0 0.0
  %1332 = vmatpush1.msra.mxu0 0.0
  %1333 = vmatprep.subr.mxu0 0.0
  %1334 = vmatpush1.msra.mxu0 0.0
  %1335 = vmatprep.subr.mxu0 0.0
  %1336 = vmatpush1.msra.mxu0 0.0
  %1337 = vmatprep.subr.mxu0 0.0
  %1338 = vmatpush1.msra.mxu0 0.0
  %1339 = vmatprep.subr.mxu0 0.0
  %1340 = vmatpush1.msra.mxu0 0.0
  %1341 = vmatprep.subr.mxu0 0.0
  %1342 = vmatpush1.msra.mxu0 0.0
  %1343 = vmatprep.subr.mxu0 0.0
  %1344 = vmatpush1.msra.mxu0 0.0
  %1345 = vmatprep.subr.mxu0 0.0
  %1346 = vmatpush1.msra.mxu0 0.0
  %1347 = vmatprep.subr.mxu0 0.0
  %1348 = vmatpush1.msra.mxu0 0.0
  %1349 = vmatprep.subr.mxu0 0.0
  %1350 = vmatpush1.msra.mxu0 0.0
  %1351 = vmatprep.subr.mxu0 0.0
  %1352 = vmatpush1.msra.mxu0 0.0
  %1353 = vmatprep.subr.mxu0 0.0
  %1354 = vmatpush1.msra.mxu0 0.0
  %1355 = vmatprep.subr.mxu0 0.0
  %1356 = vmatpush1.msra.mxu0 0.0
  %1357 = vmatprep.subr.mxu0 0.0
  %1358 = vmatpush1.msra.mxu0 0.0
  %1359 = vmatprep.subr.mxu0 0.0
  %1360 = vmatpush1.msra.mxu0 0.0
  %1361 = vmatprep.subr.mxu0 0.0
  %1362 = vmatpush1.msra.mxu0 0.0
  %1363 = vmatprep.subr.mxu0 0.0
  %1364 = vmatpush1.msra.mxu0 0.0
  %1365 = vmatprep.subr.mxu0 0.0
  %1366 = vmatpush1.msra.mxu0 0.0
  %1367 = vmatprep.subr.mxu0 0.0
  %1368 = vmatpush1.msra.mxu0 0.0
  %1369 = vmatprep.subr.mxu0 0.0
  %1370 = vmatpush1.msra.mxu0 0.0
  %1371 = vmatprep.subr.mxu0 0.0
  %1372 = vmatpush1.msra.mxu0 0.0
  %1373 = vmatprep.mubr.f32.mxu0 0.0
  %1374 = vmatmul.mubr.f32.gmra.mrb[0].mxu0 %v1307
  %v1375 = vpop.f32.mrb[0].mxu0
  %v1376 = vadd.f32 0.0, %v1375
  %v1377 = vpop.f32.mrb[0].mxu0
  %v1378 = vadd.f32 0.0, %v1377
  %1379 = vdwg.mxu0
  %1381 = vrot.lane.b32.xlu0 %v1275, 32
  %v1382 = vpop.permute.xlu0 %1381
  %v1383 = vsel %vm72, %v1382, 0
  %1385 = vmatprep.subr.mxu0 0.0
  %1386 = vmatpush1.msra.mxu0 %v31
  %1387 = vmatprep.subr.mxu0 0.0
  %1388 = vmatpush1.msra.mxu0 %v32
  %1389 = vmatprep.subr.mxu0 0.0
  %1390 = vmatpush1.msra.mxu0 %v33
  %1391 = vmatprep.subr.mxu0 0.0
  %1392 = vmatpush1.msra.mxu0 %v34
  %1393 = vmatprep.subr.mxu0 0.0
  %1394 = vmatpush1.msra.mxu0 0.0
  %1395 = vmatprep.subr.mxu0 0.0
  %1396 = vmatpush1.msra.mxu0 0.0
  %1397 = vmatprep.subr.mxu0 0.0
  %1398 = vmatpush1.msra.mxu0 0.0
  %1399 = vmatprep.subr.mxu0 0.0
  %1400 = vmatpush1.msra.mxu0 0.0
  %1401 = vmatprep.subr.mxu0 0.0
  %1402 = vmatpush1.msra.mxu0 0.0
  %1403 = vmatprep.subr.mxu0 0.0
  %1404 = vmatpush1.msra.mxu0 0.0
  %1405 = vmatprep.subr.mxu0 0.0
  %1406 = vmatpush1.msra.mxu0 0.0
  %1407 = vmatprep.subr.mxu0 0.0
  %1408 = vmatpush1.msra.mxu0 0.0
  %1409 = vmatprep.subr.mxu0 0.0
  %1410 = vmatpush1.msra.mxu0 0.0
  %1411 = vmatprep.subr.mxu0 0.0
  %1412 = vmatpush1.msra.mxu0 0.0
  %1413 = vmatprep.subr.mxu0 0.0
  %1414 = vmatpush1.msra.mxu0 0.0
  %1415 = vmatprep.subr.mxu0 0.0
  %1416 = vmatpush1.msra.mxu0 0.0
  %1417 = vmatprep.subr.mxu0 0.0
  %1418 = vmatpush1.msra.mxu0 0.0
  %1419 = vmatprep.subr.mxu0 0.0
  %1420 = vmatpush1.msra.mxu0 0.0
  %1421 = vmatprep.subr.mxu0 0.0
  %1422 = vmatpush1.msra.mxu0 0.0
  %1423 = vmatprep.subr.mxu0 0.0
  %1424 = vmatpush1.msra.mxu0 0.0
  %1425 = vmatprep.subr.mxu0 0.0
  %1426 = vmatpush1.msra.mxu0 0.0
  %1427 = vmatprep.subr.mxu0 0.0
  %1428 = vmatpush1.msra.mxu0 0.0
  %1429 = vmatprep.subr.mxu0 0.0
  %1430 = vmatpush1.msra.mxu0 0.0
  %1431 = vmatprep.subr.mxu0 0.0
  %1432 = vmatpush1.msra.mxu0 0.0
  %1433 = vmatprep.subr.mxu0 0.0
  %1434 = vmatpush1.msra.mxu0 0.0
  %1435 = vmatprep.subr.mxu0 0.0
  %1436 = vmatpush1.msra.mxu0 0.0
  %1437 = vmatprep.subr.mxu0 0.0
  %1438 = vmatpush1.msra.mxu0 0.0
  %1439 = vmatprep.subr.mxu0 0.0
  %1440 = vmatpush1.msra.mxu0 0.0
  %1441 = vmatprep.subr.mxu0 0.0
  %1442 = vmatpush1.msra.mxu0 0.0
  %1443 = vmatprep.subr.mxu0 0.0
  %1444 = vmatpush1.msra.mxu0 0.0
  %1445 = vmatprep.subr.mxu0 0.0
  %1446 = vmatpush1.msra.mxu0 0.0
  %1447 = vmatprep.subr.mxu0 0.0
  %1448 = vmatpush1.msra.mxu0 0.0
  %1449 = vmatprep.mubr.f32.mxu0 0.0
  %1450 = vmatmul.mubr.f32.gmra.mrb[0].mxu0 %v1383
  %v1451 = vpop.f32.mrb[0].mxu0
  %v1452 = vadd.f32 0.0, %v1451
  %v1453 = vpop.f32.mrb[0].mxu0
  %1454 = vdwg.mxu0
  %v1455 = vadd.f32 %v1378, %v1452
  %v1456 = vadd.f32 %v1455, %v40
  %v1457 = vxor.u32 %v1456, 2147483648
  %v1458 = vmul.f32 %v1457, 1.442695
  %v1459 = vpow.pop %v1458
  %v1460 = vadd.f32 %v1459, 1.0
  %v1461 = vrcp.pop %v1460
  %v1462 = vmul.f32 1.0, %v1461
  %v1463 = vmul.f32 %v1462, 2.0
  %v1464 = vsub.f32 %v1463, 1.0
  %v1465 = vmul.f32 %v1462, %v1269
  %1467 = vrot.lane.b32.xlu0 %v1464, 64
  %v1468 = vpop.permute.xlu0 %1467
  %v1470 = vmul.f32 %v1462, %v1468
  %1472 = vrot.lane.b32.xlu0 %v1470, 32
  %v1473 = vpop.permute.xlu0 %1472
  %v1475 = vadd.f32 %v1465, %v1473
  %v1476 = vtanh.pop %v1475
  %1478 = vrot.lane.b32.xlu0 %v1476, 64
  %v1479 = vpop.permute.xlu0 %1478
  %v1481 = vmul.f32 %v1462, %v1479
  %s1482 = scalar_lea.vmem %s0, 56
  %v1483 = vld [vmem:[%s1482] sm:$0xff]
  %v1484 = vadd.f32 %v1483, %v1376
  %v1485 = vxor.u32 %v1484, 2147483648
  %v1486 = vmul.f32 %v1485, 1.442695
  %v1487 = vpow.pop %v1486
  %v1488 = vadd.f32 %v1487, 1.0
  %v1489 = vrcp.pop %v1488
  %v1490 = vmul.f32 1.0, %v1489
  %v1491 = vmul.f32 %v1490, 2.0
  %v1492 = vsub.f32 %v1491, 1.0
  %v1493 = vmul.f32 %v1490, %v1297
  %1495 = vrot.lane.b32.xlu0 %v1492, 64
  %v1496 = vpop.permute.xlu0 %1495
  %v1498 = vmul.f32 %v1490, %v1496
  %1500 = vrot.lane.b32.xlu0 %v1498, 32
  %v1501 = vpop.permute.xlu0 %1500
  %v1503 = vadd.f32 %v1493, %v1501
  %v1504 = vtanh.pop %v1503
  %1506 = vrot.lane.b32.xlu0 %v1504, 64
  %v1507 = vpop.permute.xlu0 %1506
  %v1509 = vmul.f32 %v1490, %v1507
  %1511 = vrot.lane.b32.xlu0 %v1509, 32
  %v1512 = vpop.permute.xlu0 %1511
  %v1513 = vsel %vm72, %v1512, 0
  %1515 = vmatprep.subr.mxu0 %v24
  %1516 = vmatpush1.msra.mxu0 %v23
  %1517 = vmatprep.subr.mxu0 %v26
  %1518 = vmatpush1.msra.mxu0 %v25
  %1519 = vmatprep.subr.mxu0 %v28
  %1520 = vmatpush1.msra.mxu0 %v27
  %1521 = vmatprep.subr.mxu0 %v30
  %1522 = vmatpush1.msra.mxu0 %v29
  %1523 = vmatprep.subr.mxu0 0.0
  %1524 = vmatpush1.msra.mxu0 0.0
  %1525 = vmatprep.subr.mxu0 0.0
  %1526 = vmatpush1.msra.mxu0 0.0
  %1527 = vmatprep.subr.mxu0 0.0
  %1528 = vmatpush1.msra.mxu0 0.0
  %1529 = vmatprep.subr.mxu0 0.0
  %1530 = vmatpush1.msra.mxu0 0.0
  %1531 = vmatprep.subr.mxu0 0.0
  %1532 = vmatpush1.msra.mxu0 0.0
  %1533 = vmatprep.subr.mxu0 0.0
  %1534 = vmatpush1.msra.mxu0 0.0
  %1535 = vmatprep.subr.mxu0 0.0
  %1536 = vmatpush1.msra.mxu0 0.0
  %1537 = vmatprep.subr.mxu0 0.0
  %1538 = vmatpush1.msra.mxu0 0.0
  %1539 = vmatprep.subr.mxu0 0.0
  %1540 = vmatpush1.msra.mxu0 0.0
  %1541 = vmatprep.subr.mxu0 0.0
  %1542 = vmatpush1.msra.mxu0 0.0
  %1543 = vmatprep.subr.mxu0 0.0
  %1544 = vmatpush1.msra.mxu0 0.0
  %1545 = vmatprep.subr.mxu0 0.0
  %1546 = vmatpush1.msra.mxu0 0.0
  %1547 = vmatprep.subr.mxu0 0.0
  %1548 = vmatpush1.msra.mxu0 0.0
  %1549 = vmatprep.subr.mxu0 0.0
  %1550 = vmatpush1.msra.mxu0 0.0
  %1551 = vmatprep.subr.mxu0 0.0
  %1552 = vmatpush1.msra.mxu0 0.0
  %1553 = vmatprep.subr.mxu0 0.0
  %1554 = vmatpush1.msra.mxu0 0.0
  %1555 = vmatprep.subr.mxu0 0.0
  %1556 = vmatpush1.msra.mxu0 0.0
  %1557 = vmatprep.subr.mxu0 0.0
  %1558 = vmatpush1.msra.mxu0 0.0
  %1559 = vmatprep.subr.mxu0 0.0
  %1560 = vmatpush1.msra.mxu0 0.0
  %1561 = vmatprep.subr.mxu0 0.0
  %1562 = vmatpush1.msra.mxu0 0.0
  %1563 = vmatprep.subr.mxu0 0.0
  %1564 = vmatpush1.msra.mxu0 0.0
  %1565 = vmatprep.subr.mxu0 0.0
  %1566 = vmatpush1.msra.mxu0 0.0
  %1567 = vmatprep.subr.mxu0 0.0
  %1568 = vmatpush1.msra.mxu0 0.0
  %1569 = vmatprep.subr.mxu0 0.0
  %1570 = vmatpush1.msra.mxu0 0.0
  %1571 = vmatprep.subr.mxu0 0.0
  %1572 = vmatpush1.msra.mxu0 0.0
  %1573 = vmatprep.subr.mxu0 0.0
  %1574 = vmatpush1.msra.mxu0 0.0
  %1575 = vmatprep.subr.mxu0 0.0
  %1576 = vmatpush1.msra.mxu0 0.0
  %1577 = vmatprep.subr.mxu0 0.0
  %1578 = vmatpush1.msra.mxu0 0.0
  %1579 = vmatprep.mubr.f32.mxu0 0.0
  %1580 = vmatmul.mubr.f32.gmra.mrb[0].mxu0 %v1513
  %v1581 = vpop.f32.mrb[0].mxu0
  %v1582 = vpop.f32.mrb[0].mxu0
  %v1583 = vadd.f32 0.0, %v1582
  %1584 = vdwg.mxu0
  %1586 = vrot.lane.b32.xlu0 %v1481, 32
  %v1587 = vpop.permute.xlu0 %1586
  %v1588 = vsel %vm72, %v1587, 0
  %1590 = vmatprep.subr.mxu0 0.0
  %1591 = vmatpush1.msra.mxu0 %v31
  %1592 = vmatprep.subr.mxu0 0.0
  %1593 = vmatpush1.msra.mxu0 %v32
  %1594 = vmatprep.subr.mxu0 0.0
  %1595 = vmatpush1.msra.mxu0 %v33
  %1596 = vmatprep.subr.mxu0 0.0
  %1597 = vmatpush1.msra.mxu0 %v34
  %1598 = vmatprep.subr.mxu0 0.0
  %1599 = vmatpush1.msra.mxu0 0.0
  %1600 = vmatprep.subr.mxu0 0.0
  %1601 = vmatpush1.msra.mxu0 0.0
  %1602 = vmatprep.subr.mxu0 0.0
  %1603 = vmatpush1.msra.mxu0 0.0
  %1604 = vmatprep.subr.mxu0 0.0
  %1605 = vmatpush1.msra.mxu0 0.0
  %1606 = vmatprep.subr.mxu0 0.0
  %1607 = vmatpush1.msra.mxu0 0.0
  %1608 = vmatprep.subr.mxu0 0.0
  %1609 = vmatpush1.msra.mxu0 0.0
  %1610 = vmatprep.subr.mxu0 0.0
  %1611 = vmatpush1.msra.mxu0 0.0
  %1612 = vmatprep.subr.mxu0 0.0
  %1613 = vmatpush1.msra.mxu0 0.0
  %1614 = vmatprep.subr.mxu0 0.0
  %1615 = vmatpush1.msra.mxu0 0.0
  %1616 = vmatprep.subr.mxu0 0.0
  %1617 = vmatpush1.msra.mxu0 0.0
  %1618 = vmatprep.subr.mxu0 0.0
  %1619 = vmatpush1.msra.mxu0 0.0
  %1620 = vmatprep.subr.mxu0 0.0
  %1621 = vmatpush1.msra.mxu0 0.0
  %1622 = vmatprep.subr.mxu0 0.0
  %1623 = vmatpush1.msra.mxu0 0.0
  %1624 = vmatprep.subr.mxu0 0.0
  %1625 = vmatpush1.msra.mxu0 0.0
  %1626 = vmatprep.subr.mxu0 0.0
  %1627 = vmatpush1.msra.mxu0 0.0
  %1628 = vmatprep.subr.mxu0 0.0
  %1629 = vmatpush1.msra.mxu0 0.0
  %1630 = vmatprep.subr.mxu0 0.0
  %1631 = vmatpush1.msra.mxu0 0.0
  %1632 = vmatprep.subr.mxu0 0.0
  %1633 = vmatpush1.msra.mxu0 0.0
  %1634 = vmatprep.subr.mxu0 0.0
  %1635 = vmatpush1.msra.mxu0 0.0
  %1636 = vmatprep.subr.mxu0 0.0
  %1637 = vmatpush1.msra.mxu0 0.0
  %1638 = vmatprep.subr.mxu0 0.0
  %1639 = vmatpush1.msra.mxu0 0.0
  %1640 = vmatprep.subr.mxu0 0.0
  %1641 = vmatpush1.msra.mxu0 0.0
  %1642 = vmatprep.subr.mxu0 0.0
  %1643 = vmatpush1.msra.mxu0 0.0
  %1644 = vmatprep.subr.mxu0 0.0
  %1645 = vmatpush1.msra.mxu0 0.0
  %1646 = vmatprep.subr.mxu0 0.0
  %1647 = vmatpush1.msra.mxu0 0.0
  %1648 = vmatprep.subr.mxu0 0.0
  %1649 = vmatpush1.msra.mxu0 0.0
  %1650 = vmatprep.subr.mxu0 0.0
  %1651 = vmatpush1.msra.mxu0 0.0
  %1652 = vmatprep.subr.mxu0 0.0
  %1653 = vmatpush1.msra.mxu0 0.0
  %1654 = vmatprep.mubr.f32.mxu0 0.0
  %1655 = vmatmul.mubr.f32.gmra.mrb[0].mxu0 %v1588
  %v1656 = vpop.f32.mrb[0].mxu0
  %v1657 = vadd.f32 0.0, %v1656
  %v1658 = vpop.f32.mrb[0].mxu0
  %1659 = vdwg.mxu0
  %v1660 = vadd.f32 %v1583, %v1657
  %v1661 = vadd.f32 %v1660, %v40
  %v1662 = vxor.u32 %v1661, 2147483648
  %v1663 = vmul.f32 %v1662, 1.442695
  %v1664 = vpow.pop %v1663
  %v1665 = vadd.f32 %v1664, 1.0
  %v1666 = vrcp.pop %v1665
  %v1667 = vmul.f32 1.0, %v1666
  %v1668 = vmul.f32 %v1667, 2.0
  %v1669 = vsub.f32 %v1668, 1.0
  %v1670 = vmul.f32 %v1667, %v1475
  %1672 = vrot.lane.b32.xlu0 %v1669, 64
  %v1673 = vpop.permute.xlu0 %1672
  %v1675 = vmul.f32 %v1667, %v1673
  %1677 = vrot.lane.b32.xlu0 %v1675, 32
  %v1678 = vpop.permute.xlu0 %1677
  %v1680 = vadd.f32 %v1670, %v1678
  %v1681 = vtanh.pop %v1680
  %1683 = vrot.lane.b32.xlu0 %v1681, 64
  %v1684 = vpop.permute.xlu0 %1683
  %v1686 = vmul.f32 %v1667, %v1684
  %v1687 = vld [vmem:[%s4] sm:$0xff]
  %v1688 = vld [vmem:[%s4 + $0x8] sm:$0xff]
  %v1689 = vld [vmem:[%s4 + $0x10] sm:$0xff]
  %v1690 = vld [vmem:[%s4 + $0x18] sm:$0xff]
  %v1691 = vld [vmem:[%s5] sm:$0x1]
  %v1693 = vlaneseq
  %v1694 = vshrl.u32 %v1693, 7
  %v1695 = vsub.s32 0, %v1694
  %v1696 = vrot.slane %v1691, %v1695
  %1699 = vrot.lane.b32.xlu0 %v1686, 32
  %v1700 = vpop.permute.xlu0 %1699
  %v1701 = vsel %vm72, %v1700, 0
  %1703 = vmatprep.subr.mxu0 0.0
  %1704 = vmatpush1.msra.mxu0 %v1687
  %1705 = vmatprep.subr.mxu0 0.0
  %1706 = vmatpush1.msra.mxu0 %v1688
  %1707 = vmatprep.subr.mxu0 0.0
  %1708 = vmatpush1.msra.mxu0 %v1689
  %1709 = vmatprep.subr.mxu0 0.0
  %1710 = vmatpush1.msra.mxu0 %v1690
  %1711 = vmatprep.subr.mxu0 0.0
  %1712 = vmatpush1.msra.mxu0 0.0
  %1713 = vmatprep.subr.mxu0 0.0
  %1714 = vmatpush1.msra.mxu0 0.0
  %1715 = vmatprep.subr.mxu0 0.0
  %1716 = vmatpush1.msra.mxu0 0.0
  %1717 = vmatprep.subr.mxu0 0.0
  %1718 = vmatpush1.msra.mxu0 0.0
  %1719 = vmatprep.subr.mxu0 0.0
  %1720 = vmatpush1.msra.mxu0 0.0
  %1721 = vmatprep.subr.mxu0 0.0
  %1722 = vmatpush1.msra.mxu0 0.0
  %1723 = vmatprep.subr.mxu0 0.0
  %1724 = vmatpush1.msra.mxu0 0.0
  %1725 = vmatprep.subr.mxu0 0.0
  %1726 = vmatpush1.msra.mxu0 0.0
  %1727 = vmatprep.subr.mxu0 0.0
  %1728 = vmatpush1.msra.mxu0 0.0
  %1729 = vmatprep.subr.mxu0 0.0
  %1730 = vmatpush1.msra.mxu0 0.0
  %1731 = vmatprep.subr.mxu0 0.0
  %1732 = vmatpush1.msra.mxu0 0.0
  %1733 = vmatprep.subr.mxu0 0.0
  %1734 = vmatpush1.msra.mxu0 0.0
  %1735 = vmatprep.subr.mxu0 0.0
  %1736 = vmatpush1.msra.mxu0 0.0
  %1737 = vmatprep.subr.mxu0 0.0
  %1738 = vmatpush1.msra.mxu0 0.0
  %1739 = vmatprep.subr.mxu0 0.0
  %1740 = vmatpush1.msra.mxu0 0.0
  %1741 = vmatprep.subr.mxu0 0.0
  %1742 = vmatpush1.msra.mxu0 0.0
  %1743 = vmatprep.subr.mxu0 0.0
  %1744 = vmatpush1.msra.mxu0 0.0
  %1745 = vmatprep.subr.mxu0 0.0
  %1746 = vmatpush1.msra.mxu0 0.0
  %1747 = vmatprep.subr.mxu0 0.0
  %1748 = vmatpush1.msra.mxu0 0.0
  %1749 = vmatprep.subr.mxu0 0.0
  %1750 = vmatpush1.msra.mxu0 0.0
  %1751 = vmatprep.subr.mxu0 0.0
  %1752 = vmatpush1.msra.mxu0 0.0
  %1753 = vmatprep.subr.mxu0 0.0
  %1754 = vmatpush1.msra.mxu0 0.0
  %1755 = vmatprep.subr.mxu0 0.0
  %1756 = vmatpush1.msra.mxu0 0.0
  %1757 = vmatprep.subr.mxu0 0.0
  %1758 = vmatpush1.msra.mxu0 0.0
  %1759 = vmatprep.subr.mxu0 0.0
  %1760 = vmatpush1.msra.mxu0 0.0
  %1761 = vmatprep.subr.mxu0 0.0
  %1762 = vmatpush1.msra.mxu0 0.0
  %1763 = vmatprep.subr.mxu0 0.0
  %1764 = vmatpush1.msra.mxu0 0.0
  %1765 = vmatprep.subr.mxu0 0.0
  %1766 = vmatpush1.msra.mxu0 0.0
  %1767 = vmatprep.mubr.f32.mxu0 0.0
  %1768 = vmatmul.mubr.f32.gmra.mrb[0].mxu0 %v1701
  %v1769 = vpop.f32.mrb[0].mxu0
  %v1770 = vadd.f32 %v1696, %v1769
  %v1771 = vpop.f32.mrb[0].mxu0
  %1772 = vdwg.mxu0
  %1773 = vst [vmem:[%s6] sm:$0xff] %v1770
  // Predicated region
  $region26: #{_lstm_model_forward.1} parent=0 // pred_check
    _
  $region27: #{_lstm_model_forward.1} parent=0 // pred_check_branch
    %1775 = sbr.rel (0) target = $region29
  $region28: #{_lstm_model_forward.1} parent=0 // pred_region
    _
  $region29: #{_lstm_model_forward.1} parent=0 // pred_fallthru
    _
  // Predicated region
  $region30: #{_lstm_model_forward.1} parent=0 // pred_check
    _
  $region31: #{_lstm_model_forward.1} parent=0 // pred_check_branch
    %1777 = sbr.rel (0) target = $region33
  $region32: #{_lstm_model_forward.1} parent=0 // pred_region
    _
  $region33: #{_lstm_model_forward.1} parent=0 // pred_fallthru
    _

</llo_original>
